<compile_context>
chip_gen: v7x
topology: tpu7x:2x2x1
jax: 0.10.0
libtpu: 0.0.40
codegen_flags: <defaults>
</compile_context>

<pallas_src>
import functools

import jax
import jax.numpy as jnp
from jax.experimental import pallas as pl
from jax.experimental.pallas import tpu as pltpu

LANE = 128


def _round_up(x, m):
    return (x + m - 1) // m * m


# ----------------------------------------------------------------------------
# Fused NLDS forward kernel: one block of Bblk batch elements per grid step
# ----------------------------------------------------------------------------
def _make_nlds_kernel(num_conv_layers, kernel_size, mxu_dtype):
    pad = kernel_size // 2
    K = kernel_size
    n_conv_w = 2 * num_conv_layers
    f32 = jnp.float32

    def kernel(*refs):
        # ---- unpack refs: inputs | output | scratch --------------------------
        x_ref, cf_ref = refs[0], refs[1]
        conv_refs = refs[2:2 + n_conv_w]
        w_enc_ref, b_enc_ref = refs[2 + n_conv_w], refs[3 + n_conv_w]
        w1s_ref, w1c_ref, b1_ref, w2_ref, b2_ref = refs[4 + n_conv_w:9 + n_conv_w]
        ro_w1_ref, ro_b1_ref, ro_w2_ref, ro_b2_ref = refs[9 + n_conv_w:13 + n_conv_w]
        o_ref = refs[13 + n_conv_w]
        stage_refs = refs[14 + n_conv_w:14 + n_conv_w + num_conv_layers]

        Bb, T, _ = x_ref.shape
        Hf = cf_ref.shape[1]

        # ---- CNN encoder: im2col conv stack ('same' padding via VMEM halo) ---
        prev = x_ref[...]                                  # (Bb, T, Cin) f32
        h2 = None
        for li in range(num_conv_layers):
            s = stage_refs[li]                             # (Bb, T + 2*pad, Cin)
            cin = s.shape[-1]
            # Zero only the halo rows each step (center is rewritten below);
            # safe even when the "parallel" grid is split across TensorCores.
            zhalo = jnp.zeros((Bb, pad, cin), f32)
            s[:, 0:pad, :] = zhalo
            s[:, pad + T:2 * pad + T, :] = zhalo
            s[:, pad:pad + T, :] = prev
            w_ref = conv_refs[2 * li]                      # (K*Cin, Cout) im2col weight
            b_ref = conv_refs[2 * li + 1]                  # (1, Cout)
            # im2col: one fat matmul per conv layer.
            cols = jnp.concatenate([s[:, k:k + T, :] for k in range(K)], axis=2)
            cols2 = cols.reshape(Bb * T, K * cin)
            acc = jnp.dot(cols2.astype(mxu_dtype), w_ref[...],
                          preferred_element_type=f32)
            h2 = jnp.maximum(acc + b_ref[...], 0.0)        # (Bb*T, Cout) f32
            if li + 1 < num_conv_layers:
                prev = h2.reshape(Bb, T, h2.shape[-1])

        # ---- encoder FC: single (Bb, T*F) x (T*F, L) contraction --------------
        F = h2.shape[-1]
        h3 = h2.reshape(Bb, T, F)
        # (Bb, T*F) flatten with columns ordered t*F + f (the matching permutation
        # of the PyTorch (F, T)-major weight is done at trace time), built with
        # slice + lane-concat which lowers robustly.
        h_flat = jnp.concatenate([h3[:, t, :] for t in range(T)], axis=1)
        state = (jnp.dot(h_flat.astype(mxu_dtype), w_enc_ref[...],
                         preferred_element_type=f32) + b_enc_ref[...])   # (Bb, L)

        # ---- latent rollout (serial recurrence) -------------------------------
        # Control-dependent half hoisted out of the loop as one matmul.
        cf2 = jnp.concatenate([cf_ref[:, i, :] for i in range(Hf)], axis=0)
        cpre = (jnp.dot(cf2.astype(mxu_dtype), w1c_ref[...],
                        preferred_element_type=f32) + b1_ref[...])       # (Hf*Bb, H1)
        w1s = w1s_ref[...]                                 # hoisted loop invariants
        w2 = w2_ref[...]
        b2 = b2_ref[...]
        # TODO(synk): fully unrolled; switch to lax.fori_loop(..., unroll=k) if Hf
        # ever grows large enough to bloat code size / compile time.
        states = []
        for i in range(Hf):
            pre = (jnp.dot(state.astype(mxu_dtype), w1s, preferred_element_type=f32)
                   + cpre[i * Bb:(i + 1) * Bb, :])
            hid = jnp.maximum(pre, 0.0)
            state = state + jnp.dot(hid.astype(mxu_dtype), w2,
                                    preferred_element_type=f32) + b2
            states.append(state)                           # states stay in vregs

        # ---- readout MLP over all Hf*Bb states in one fat matmul --------------
        hs = jnp.concatenate(states, axis=0)               # (Hf*Bb, L), step-major
        r = jnp.maximum(jnp.dot(hs.astype(mxu_dtype), ro_w1_ref[...],
                                preferred_element_type=f32) + ro_b1_ref[...], 0.0)
        out = (jnp.dot(r.astype(mxu_dtype), ro_w2_ref[...],
                       preferred_element_type=f32) + ro_b2_ref[...])     # (Hf*Bb, 128)
        o_ref[...] = out.reshape(Hf, Bb, LANE)             # lane-dense unmasked store

    return kernel


# ----------------------------------------------------------------------------
# Wrapper: trace-time weight re-layout, batch blocking, single fused pallas_call
# ----------------------------------------------------------------------------
def nlds_forward(params, target_past, control_past, control_future, *,
                 latent_size, block_batch=256, mxu_dtype=jnp.float32):
    f32 = jnp.float32
    B, Hp, _ = target_past.shape
    _, Hf, Cc = control_future.shape
    L = latent_size

    conv = params["conv"]
    K = int(conv[0]["w"].shape[0])
    assert K % 2 == 1, "PyTorch-style 'same' conv padding requires odd kernel_size"
    pad = K // 2
    num_layers = len(conv)
    f_last = int(conv[-1]["w"].shape[-1])
    H1 = int(params["dyn_w1"].shape[1])
    Hr = int(params["ro_w1"].shape[1])
    num_output = int(params["ro_w2"].shape[1])
    assert num_output <= LANE

    # channel concat of the past (== torch.cat((target_past, control_past), dim=2))
    x_past = jnp.concatenate([target_past, control_past], axis=2).astype(f32)
    C = int(x_past.shape[2])
    cf = control_future.astype(f32)

    # ---- batch blocking: Bblk batch rows per grid step ------------------------
    # 256 is a multiple of 128 (v5e MXU) and fills v6e/v7x 256-wide MXUs; at these
    # feature sizes the double-buffered blocks stay far under v7x's 64 MiB VMEM.
    Bblk = _round_up(min(block_batch, _round_up(B, 8)), 8)
    Bpad = _round_up(B, Bblk)
    x_past = jnp.pad(x_past, ((0, Bpad - B), (0, 0), (0, 0)))
    cf = jnp.pad(cf, ((0, Bpad - B), (0, 0), (0, 0)))
    grid = (Bpad // Bblk,)

    # ---- fold all layout plumbing into the weights (tiny trace-time ops) ------
    weights = []
    for layer in conv:
        cout = int(layer["w"].shape[-1])
        cin = int(layer["w"].shape[1])
        weights += [layer["w"].reshape(K * cin, cout).astype(mxu_dtype),  # im2col
                    layer["b"].reshape(1, cout).astype(f32)]
    # PyTorch flattens (B, F, T) -> row f*Hp + t; kernel flattens time-major (t*F+f).
    w_enc = (params["enc_fc_w"].reshape(f_last, Hp, L)
             .transpose(1, 0, 2).reshape(Hp * f_last, L))
    weights += [w_enc.astype(mxu_dtype),
                params["enc_fc_b"].reshape(1, L).astype(f32)]
    # concat([state, control]) @ W1 == state @ W1[:L] + control @ W1[L:]
    weights += [params["dyn_w1"][:L].astype(mxu_dtype),
                params["dyn_w1"][L:].astype(mxu_dtype),
                params["dyn_b1"].reshape(1, H1).astype(f32),
                params["dyn_w2"].astype(mxu_dtype),
                params["dyn_b2"].reshape(1, L).astype(f32)]
    # readout: zero-pad final layer to 128 output lanes -> lane-dense HBM store.
    ro_w2p = jnp.zeros((Hr, LANE), f32).at[:, :num_output].set(params["ro_w2"])
    ro_b2p = jnp.zeros((1, LANE), f32).at[:, :num_output].set(
        params["ro_b2"].reshape(1, num_output))
    weights += [params["ro_w1"].astype(mxu_dtype),
                params["ro_b1"].reshape(1, Hr).astype(f32),
                ro_w2p.astype(mxu_dtype), ro_b2p]

    def rep_spec(arr):  # whole-array block, same for every grid step (DMA'd once)
        zero = (0,) * arr.ndim
        # TODO(synk): pipeline_mode=pl.Buffered(1) would drop the (negligible today)
        # double-buffer VMEM reservation for these constant-index weight blocks.
        return pl.BlockSpec(arr.shape, lambda g, _z=zero: _z)

    in_specs = ([pl.BlockSpec((Bblk, Hp, C), lambda g: (g, 0, 0)),
                 pl.BlockSpec((Bblk, Hf, Cc), lambda g: (g, 0, 0))]
                + [rep_spec(w) for w in weights])

    cins = [C] + [int(l["w"].shape[-1]) for l in conv[:-1]]
    scratch = [pltpu.VMEM((Bblk, Hp + 2 * pad, c), f32) for c in cins]

    kernel = _make_nlds_kernel(num_layers, K, mxu_dtype)

    out_pad = pl.pallas_call(
        kernel,
        out_shape=jax.ShapeDtypeStruct((Hf, Bpad, LANE), f32),
        grid=grid,                                  # batch-blocked grid (v7x: 2 TCs)
        in_specs=in_specs,
        out_specs=pl.BlockSpec((Hf, Bblk, LANE), lambda g: (0, g, 0)),
        scratch_shapes=scratch,
        compiler_params=pltpu.CompilerParams(
            dimension_semantics=("parallel",),
            vmem_limit_bytes=48 * 1024 * 1024),     # stays under v7x's 64 MiB physical
    )(x_past, cf, *weights)

    # (Hf, B, num_output) -> (B, Hf, num_output): wrapper-side layout plumbing only.
    return jnp.transpose(out_pad[:, :B, :num_output], (1, 0, 2))


# ----------------------------------------------------------------------------
# Parameter construction (deterministic, synthetic)
# ----------------------------------------------------------------------------
def init_params(key, *, num_target, num_control, num_aux, horizon_past,
                num_filters, num_hidden_dynamics, num_hidden_readout,
                kernel_size, latent_size, num_output):
    ks = iter(jax.random.split(key, 32))

    def w(shape, scale=0.1):
        return scale * jax.random.normal(next(ks), shape, jnp.float32)

    p = {}
    # CNN1d encoder: conv stack (same padding) + flatten + single FC to latent.
    cin = num_target + num_control + num_aux
    p["conv"] = []
    for cout in num_filters:
        p["conv"].append({"w": w((kernel_size, cin, cout)), "b": w((cout,))})
        cin = cout
    p["enc_fc_w"] = w((num_filters[-1] * horizon_past, latent_size))
    p["enc_fc_b"] = w((latent_size,))

    # dynamics MLP: [latent + num_control] + num_hidden_dynamics + [latent]
    h1 = num_hidden_dynamics[0]
    p["dyn_w1"] = w((latent_size + num_control, h1))
    p["dyn_b1"] = w((h1,))
    p["dyn_w2"] = w((h1, latent_size))
    p["dyn_b2"] = w((latent_size,))

    # readout MLP: [latent] + num_hidden_readout + [num_output]
    hr = num_hidden_readout[0]
    p["ro_w1"] = w((latent_size, hr))
    p["ro_b1"] = w((hr,))
    p["ro_w2"] = w((hr, num_output))
    p["ro_b2"] = w((num_output,))
    return p


# ----------------------------------------------------------------------------
# Pure-JAX reference (same semantics) for correctness checks
# ----------------------------------------------------------------------------
def nlds_reference(params, target_past, control_past, control_future):
    B, Hp, _ = target_past.shape
    _, Hf, _ = control_future.shape
    K = params["conv"][0]["w"].shape[0]
    pad = K // 2

    h = jnp.concatenate([target_past, control_past], axis=2)
    for layer in params["conv"]:
        xp = jnp.pad(h, ((0, 0), (pad, pad), (0, 0)))
        acc = sum(jnp.einsum("btc,cd->btd", xp[:, k:k + Hp, :], layer["w"][k])
                  for k in range(K)) + layer["b"]
        h = jax.nn.relu(acc)
    h_flat = jnp.transpose(h, (0, 2, 1)).reshape(B, -1)       # PyTorch (B, F, T) flatten
    state = h_flat @ params["enc_fc_w"] + params["enc_fc_b"]

    states = []
    for i in range(Hf):
        x1 = jnp.concatenate([state, control_future[:, i, :]], axis=1)
        hid = jax.nn.relu(x1 @ params["dyn_w1"] + params["dyn_b1"])
        state = state + hid @ params["dyn_w2"] + params["dyn_b2"]
        states.append(state)
    hidden = jnp.stack(states, axis=1)                        # (B, Hf, L)
    r = jax.nn.relu(hidden @ params["ro_w1"] + params["ro_b1"])
    return r @ params["ro_w2"] + params["ro_b2"]


if __name__ == "__main__":
    # Small, module-consistent config.
    batch = 2
    num_target = 3
    num_control = 2
    num_aux = 0
    horizon_past = 8
    horizon_future = 4
    num_filters = [8, 8]
    num_hidden_dynamics = [16]
    num_hidden_readout = [16]
    kernel_size = 3
    latent_size = 16
    likelihood_num_parameters = 2            # e.g. Gaussian (mean, scale)
    num_output = likelihood_num_parameters * num_target

    key = jax.random.PRNGKey(0)
    kp, kt, kc, kf = jax.random.split(key, 4)

    params = init_params(
        kp, num_target=num_target, num_control=num_control, num_aux=num_aux,
        horizon_past=horizon_past, num_filters=num_filters,
        num_hidden_dynamics=num_hidden_dynamics,
        num_hidden_readout=num_hidden_readout, kernel_size=kernel_size,
        latent_size=latent_size, num_output=num_output)

    target_past = jax.random.normal(kt, (batch, horizon_past, num_target), jnp.float32)
    control_past = jax.random.normal(kc, (batch, horizon_past, num_control), jnp.float32)
    control_future = jax.random.normal(kf, (batch, horizon_future, num_control), jnp.float32)

    with jax.default_matmul_precision("highest"):
        ref = nlds_reference(params, target_past, control_past, control_future)

    # f32 MXU path: tight tolerance (f32 accumulation delivers ~1e-5 here).
    fwd = jax.jit(functools.partial(nlds_forward, latent_size=latent_size))
    out = fwd(params, target_past, control_past, control_future)
    jax.block_until_ready(out)
    assert out.shape == (batch, horizon_future, num_output), out.shape
    max_err = float(jnp.max(jnp.abs(out - ref)))
    assert max_err < 1e-4, f"f32 kernel/reference mismatch: max abs err {max_err}"

    # bf16-fed MXU path (weights + dot inputs bf16, f32 accumulation, f32 elementwise):
    # a deliberate accuracy trade, validated with a bf16-appropriate tolerance.
    fwd_bf16 = jax.jit(functools.partial(
        nlds_forward, latent_size=latent_size, mxu_dtype=jnp.bfloat16))
    out_bf16 = fwd_bf16(params, target_past, control_past, control_future)
    jax.block_until_ready(out_bf16)
    max_err_bf16 = float(jnp.max(jnp.abs(out_bf16 - ref)))
    assert max_err_bf16 < 3e-2, f"bf16 kernel/reference mismatch: max abs err {max_err_bf16}"

    print("KERNEL_OK")
</pallas_src>

<mosaic_0001>
module attributes {stable_mosaic.version = 11 : i64} {
  func.func @kernel(%arg0: i32, %arg1: memref<8x8x5xf32, #tpu.memory_space<vmem>>, %arg2: memref<8x4x2xf32, #tpu.memory_space<vmem>>, %arg3: memref<15x8xf32, #tpu.memory_space<vmem>>, %arg4: memref<1x8xf32, #tpu.memory_space<vmem>>, %arg5: memref<24x8xf32, #tpu.memory_space<vmem>>, %arg6: memref<1x8xf32, #tpu.memory_space<vmem>>, %arg7: memref<64x16xf32, #tpu.memory_space<vmem>>, %arg8: memref<1x16xf32, #tpu.memory_space<vmem>>, %arg9: memref<16x16xf32, #tpu.memory_space<vmem>>, %arg10: memref<2x16xf32, #tpu.memory_space<vmem>>, %arg11: memref<1x16xf32, #tpu.memory_space<vmem>>, %arg12: memref<16x16xf32, #tpu.memory_space<vmem>>, %arg13: memref<1x16xf32, #tpu.memory_space<vmem>>, %arg14: memref<16x16xf32, #tpu.memory_space<vmem>>, %arg15: memref<1x16xf32, #tpu.memory_space<vmem>>, %arg16: memref<16x128xf32, #tpu.memory_space<vmem>>, %arg17: memref<1x128xf32, #tpu.memory_space<vmem>>, %arg18: memref<4x8x128xf32, #tpu.memory_space<vmem>>, %arg19: memref<8x10x5xf32, #tpu.memory_space<vmem>>, %arg20: memref<8x10x8xf32, #tpu.memory_space<vmem>>) attributes {dimension_semantics = [#tpu.dimension_semantics<parallel>], iteration_bounds = array<i64: 1>, scalar_prefetch = 0 : i64, scratch_operands = 2 : i64, tpu.core_type = #tpu.core_type<tc>, window_params = [{transform_indices = @transform_0, window_bounds = array<i64: 8, 8, 5>}, {transform_indices = @transform_1, window_bounds = array<i64: 8, 4, 2>}, {pipeline_mode = #tpu.pipeline_mode<synchronous>, transform_indices = @transform_2, window_bounds = array<i64: 15, 8>}, {pipeline_mode = #tpu.pipeline_mode<synchronous>, transform_indices = @transform_3, window_bounds = array<i64: 1, 8>}, {pipeline_mode = #tpu.pipeline_mode<synchronous>, transform_indices = @transform_4, window_bounds = array<i64: 24, 8>}, {pipeline_mode = #tpu.pipeline_mode<synchronous>, transform_indices = @transform_5, window_bounds = array<i64: 1, 8>}, {pipeline_mode = #tpu.pipeline_mode<synchronous>, transform_indices = @transform_6, window_bounds = array<i64: 64, 16>}, {pipeline_mode = #tpu.pipeline_mode<synchronous>, transform_indices = @transform_7, window_bounds = array<i64: 1, 16>}, {pipeline_mode = #tpu.pipeline_mode<synchronous>, transform_indices = @transform_8, window_bounds = array<i64: 16, 16>}, {pipeline_mode = #tpu.pipeline_mode<synchronous>, transform_indices = @transform_9, window_bounds = array<i64: 2, 16>}, {pipeline_mode = #tpu.pipeline_mode<synchronous>, transform_indices = @transform_10, window_bounds = array<i64: 1, 16>}, {pipeline_mode = #tpu.pipeline_mode<synchronous>, transform_indices = @transform_11, window_bounds = array<i64: 16, 16>}, {pipeline_mode = #tpu.pipeline_mode<synchronous>, transform_indices = @transform_12, window_bounds = array<i64: 1, 16>}, {pipeline_mode = #tpu.pipeline_mode<synchronous>, transform_indices = @transform_13, window_bounds = array<i64: 16, 16>}, {pipeline_mode = #tpu.pipeline_mode<synchronous>, transform_indices = @transform_14, window_bounds = array<i64: 1, 16>}, {pipeline_mode = #tpu.pipeline_mode<synchronous>, transform_indices = @transform_15, window_bounds = array<i64: 16, 128>}, {pipeline_mode = #tpu.pipeline_mode<synchronous>, transform_indices = @transform_16, window_bounds = array<i64: 1, 128>}, {transform_indices = @transform_17, window_bounds = array<i64: 4, 8, 128>}]} {
    %c0 = arith.constant 0 : index
    %c0_0 = arith.constant 0 : index
    %c0_1 = arith.constant 0 : index
    %0 = vector.load %arg1[%c0, %c0_0, %c0_1] : memref<8x8x5xf32, #tpu.memory_space<vmem>>, vector<8x8x5xf32>
    %cst = arith.constant 0.000000e+00 : f32
    %1 = vector.broadcast %cst : f32 to vector<8x1x5xf32>
    %c0_2 = arith.constant 0 : index
    %c0_3 = arith.constant 0 : index
    %c0_4 = arith.constant 0 : index
    %2 = vector.load %arg19[%c0_2, %c0_3, %c0_4] : memref<8x10x5xf32, #tpu.memory_space<vmem>>, vector<8x1x5xf32>
    tpu.vector_store %arg19[%c0_2, %c0_3, %c0_4], %1 {strides = array<i32>} : memref<8x10x5xf32, #tpu.memory_space<vmem>>, vector<8x1x5xf32>,
    %c0_5 = arith.constant 0 : index
    %c9 = arith.constant 9 : index
    %c0_6 = arith.constant 0 : index
    %3 = vector.load %arg19[%c0_5, %c9, %c0_6] : memref<8x10x5xf32, #tpu.memory_space<vmem>>, vector<8x1x5xf32>
    tpu.vector_store %arg19[%c0_5, %c9, %c0_6], %1 {strides = array<i32>} : memref<8x10x5xf32, #tpu.memory_space<vmem>>, vector<8x1x5xf32>,
    %c0_7 = arith.constant 0 : index
    %c1 = arith.constant 1 : index
    %c0_8 = arith.constant 0 : index
    %4 = vector.load %arg19[%c0_7, %c1, %c0_8] : memref<8x10x5xf32, #tpu.memory_space<vmem>>, vector<8x8x5xf32>
    tpu.vector_store %arg19[%c0_7, %c1, %c0_8], %0 {strides = array<i32>} : memref<8x10x5xf32, #tpu.memory_space<vmem>>, vector<8x8x5xf32>,
    %c0_9 = arith.constant 0 : index
    %c0_10 = arith.constant 0 : index
    %c0_11 = arith.constant 0 : index
    %5 = vector.load %arg19[%c0_9, %c0_10, %c0_11] : memref<8x10x5xf32, #tpu.memory_space<vmem>>, vector<8x8x5xf32>
    %c0_12 = arith.constant 0 : index
    %c1_13 = arith.constant 1 : index
    %c0_14 = arith.constant 0 : index
    %6 = vector.load %arg19[%c0_12, %c1_13, %c0_14] : memref<8x10x5xf32, #tpu.memory_space<vmem>>, vector<8x8x5xf32>
    %c0_15 = arith.constant 0 : index
    %c2 = arith.constant 2 : index
    %c0_16 = arith.constant 0 : index
    %7 = vector.load %arg19[%c0_15, %c2, %c0_16] : memref<8x10x5xf32, #tpu.memory_space<vmem>>, vector<8x8x5xf32>
    %8 = tpu.concatenate %5, %6, %7 in 2 : vector<8x8x5xf32>, vector<8x8x5xf32>, vector<8x8x5xf32> -> vector<8x8x15xf32>
    %9 = vector.shape_cast %8 : vector<8x8x15xf32> to vector<64x15xf32>
    %c0_17 = arith.constant 0 : index
    %c0_18 = arith.constant 0 : index
    %10 = vector.load %arg3[%c0_17, %c0_18] : memref<15x8xf32, #tpu.memory_space<vmem>>, vector<15x8xf32>
    %cst_19 = arith.constant dense<0.000000e+00> : vector<64x8xf32>
    %11 = tpu.matmul %9, %10, %cst_19 {dimension_numbers = #tpu.dot_dimension_numbers<[1], [0], [0], [1], [0, 0, 1, 1], [], []>} : vector<64x15xf32>, vector<15x8xf32>, vector<64x8xf32> -> vector<64x8xf32>
    %c0_20 = arith.constant 0 : index
    %c0_21 = arith.constant 0 : index
    %12 = vector.load %arg4[%c0_20, %c0_21] : memref<1x8xf32, #tpu.memory_space<vmem>>, vector<1x8xf32>
    %13 = vector.broadcast %12 : vector<1x8xf32> to vector<64x8xf32>
    %14 = arith.addf %11, %13 : vector<64x8xf32>
    %cst_22 = arith.constant 0.000000e+00 : f32
    %15 = vector.broadcast %cst_22 : f32 to vector<64x8xf32>
    %16 = arith.maximumf %14, %15 : vector<64x8xf32>
    %17 = vector.shape_cast %16 : vector<64x8xf32> to vector<8x8x8xf32>
    %cst_23 = arith.constant 0.000000e+00 : f32
    %18 = vector.broadcast %cst_23 : f32 to vector<8x1x8xf32>
    %c0_24 = arith.constant 0 : index
    %c0_25 = arith.constant 0 : index
    %c0_26 = arith.constant 0 : index
    %19 = vector.load %arg20[%c0_24, %c0_25, %c0_26] : memref<8x10x8xf32, #tpu.memory_space<vmem>>, vector<8x1x8xf32>
    tpu.vector_store %arg20[%c0_24, %c0_25, %c0_26], %18 {strides = array<i32>} : memref<8x10x8xf32, #tpu.memory_space<vmem>>, vector<8x1x8xf32>,
    %c0_27 = arith.constant 0 : index
    %c9_28 = arith.constant 9 : index
    %c0_29 = arith.constant 0 : index
    %20 = vector.load %arg20[%c0_27, %c9_28, %c0_29] : memref<8x10x8xf32, #tpu.memory_space<vmem>>, vector<8x1x8xf32>
    tpu.vector_store %arg20[%c0_27, %c9_28, %c0_29], %18 {strides = array<i32>} : memref<8x10x8xf32, #tpu.memory_space<vmem>>, vector<8x1x8xf32>,
    %c0_30 = arith.constant 0 : index
    %c1_31 = arith.constant 1 : index
    %c0_32 = arith.constant 0 : index
    %21 = vector.load %arg20[%c0_30, %c1_31, %c0_32] : memref<8x10x8xf32, #tpu.memory_space<vmem>>, vector<8x8x8xf32>
    tpu.vector_store %arg20[%c0_30, %c1_31, %c0_32], %17 {strides = array<i32>} : memref<8x10x8xf32, #tpu.memory_space<vmem>>, vector<8x8x8xf32>,
    %c0_33 = arith.constant 0 : index
    %c0_34 = arith.constant 0 : index
    %c0_35 = arith.constant 0 : index
    %22 = vector.load %arg20[%c0_33, %c0_34, %c0_35] : memref<8x10x8xf32, #tpu.memory_space<vmem>>, vector<8x8x8xf32>
    %c0_36 = arith.constant 0 : index
    %c1_37 = arith.constant 1 : index
    %c0_38 = arith.constant 0 : index
    %23 = vector.load %arg20[%c0_36, %c1_37, %c0_38] : memref<8x10x8xf32, #tpu.memory_space<vmem>>, vector<8x8x8xf32>
    %c0_39 = arith.constant 0 : index
    %c2_40 = arith.constant 2 : index
    %c0_41 = arith.constant 0 : index
    %24 = vector.load %arg20[%c0_39, %c2_40, %c0_41] : memref<8x10x8xf32, #tpu.memory_space<vmem>>, vector<8x8x8xf32>
    %25 = tpu.concatenate %22, %23, %24 in 2 : vector<8x8x8xf32>, vector<8x8x8xf32>, vector<8x8x8xf32> -> vector<8x8x24xf32>
    %26 = vector.shape_cast %25 : vector<8x8x24xf32> to vector<64x24xf32>
    %c0_42 = arith.constant 0 : index
    %c0_43 = arith.constant 0 : index
    %27 = vector.load %arg5[%c0_42, %c0_43] : memref<24x8xf32, #tpu.memory_space<vmem>>, vector<24x8xf32>
    %cst_44 = arith.constant dense<0.000000e+00> : vector<64x8xf32>
    %28 = tpu.matmul %26, %27, %cst_44 {dimension_numbers = #tpu.dot_dimension_numbers<[1], [0], [0], [1], [0, 0, 1, 1], [], []>} : vector<64x24xf32>, vector<24x8xf32>, vector<64x8xf32> -> vector<64x8xf32>
    %c0_45 = arith.constant 0 : index
    %c0_46 = arith.constant 0 : index
    %29 = vector.load %arg6[%c0_45, %c0_46] : memref<1x8xf32, #tpu.memory_space<vmem>>, vector<1x8xf32>
    %30 = vector.broadcast %29 : vector<1x8xf32> to vector<64x8xf32>
    %31 = arith.addf %28, %30 : vector<64x8xf32>
    %cst_47 = arith.constant 0.000000e+00 : f32
    %32 = vector.broadcast %cst_47 : f32 to vector<64x8xf32>
    %33 = arith.maximumf %31, %32 : vector<64x8xf32>
    %34 = vector.shape_cast %33 : vector<64x8xf32> to vector<8x8x8xf32>
    %35 = vector.extract_strided_slice %34 {offsets = [0, 0, 0], sizes = [8, 1, 8], strides = [1, 1, 1]} : vector<8x8x8xf32> to vector<8x1x8xf32>
    %36 = vector.shape_cast %35 : vector<8x1x8xf32> to vector<8x8xf32>
    %37 = vector.extract_strided_slice %34 {offsets = [0, 1, 0], sizes = [8, 1, 8], strides = [1, 1, 1]} : vector<8x8x8xf32> to vector<8x1x8xf32>
    %38 = vector.shape_cast %37 : vector<8x1x8xf32> to vector<8x8xf32>
    %39 = vector.extract_strided_slice %34 {offsets = [0, 2, 0], sizes = [8, 1, 8], strides = [1, 1, 1]} : vector<8x8x8xf32> to vector<8x1x8xf32>
    %40 = vector.shape_cast %39 : vector<8x1x8xf32> to vector<8x8xf32>
    %41 = vector.extract_strided_slice %34 {offsets = [0, 3, 0], sizes = [8, 1, 8], strides = [1, 1, 1]} : vector<8x8x8xf32> to vector<8x1x8xf32>
    %42 = vector.shape_cast %41 : vector<8x1x8xf32> to vector<8x8xf32>
    %43 = vector.extract_strided_slice %34 {offsets = [0, 4, 0], sizes = [8, 1, 8], strides = [1, 1, 1]} : vector<8x8x8xf32> to vector<8x1x8xf32>
    %44 = vector.shape_cast %43 : vector<8x1x8xf32> to vector<8x8xf32>
    %45 = vector.extract_strided_slice %34 {offsets = [0, 5, 0], sizes = [8, 1, 8], strides = [1, 1, 1]} : vector<8x8x8xf32> to vector<8x1x8xf32>
    %46 = vector.shape_cast %45 : vector<8x1x8xf32> to vector<8x8xf32>
    %47 = vector.extract_strided_slice %34 {offsets = [0, 6, 0], sizes = [8, 1, 8], strides = [1, 1, 1]} : vector<8x8x8xf32> to vector<8x1x8xf32>
    %48 = vector.shape_cast %47 : vector<8x1x8xf32> to vector<8x8xf32>
    %49 = vector.extract_strided_slice %34 {offsets = [0, 7, 0], sizes = [8, 1, 8], strides = [1, 1, 1]} : vector<8x8x8xf32> to vector<8x1x8xf32>
    %50 = vector.shape_cast %49 : vector<8x1x8xf32> to vector<8x8xf32>
    %51 = tpu.concatenate %36, %38, %40, %42, %44, %46, %48, %50 in 1 : vector<8x8xf32>, vector<8x8xf32>, vector<8x8xf32>, vector<8x8xf32>, vector<8x8xf32>, vector<8x8xf32>, vector<8x8xf32>, vector<8x8xf32> -> vector<8x64xf32>
    %c0_48 = arith.constant 0 : index
    %c0_49 = arith.constant 0 : index
    %52 = vector.load %arg7[%c0_48, %c0_49] : memref<64x16xf32, #tpu.memory_space<vmem>>, vector<64x16xf32>
    %cst_50 = arith.constant dense<0.000000e+00> : vector<8x16xf32>
    %53 = tpu.matmul %51, %52, %cst_50 {dimension_numbers = #tpu.dot_dimension_numbers<[1], [0], [0], [1], [0, 0, 1, 1], [], []>} : vector<8x64xf32>, vector<64x16xf32>, vector<8x16xf32> -> vector<8x16xf32>
    %c0_51 = arith.constant 0 : index
    %c0_52 = arith.constant 0 : index
    %54 = vector.load %arg8[%c0_51, %c0_52] : memref<1x16xf32, #tpu.memory_space<vmem>>, vector<1x16xf32>
    %55 = vector.broadcast %54 : vector<1x16xf32> to vector<8x16xf32>
    %56 = arith.addf %53, %55 : vector<8x16xf32>
    %c0_53 = arith.constant 0 : index
    %c0_54 = arith.constant 0 : index
    %c0_55 = arith.constant 0 : index
    %57 = vector.load %arg2[%c0_53, %c0_54, %c0_55] : memref<8x4x2xf32, #tpu.memory_space<vmem>>, vector<8x1x2xf32>
    %58 = vector.shape_cast %57 : vector<8x1x2xf32> to vector<8x2xf32>
    %c0_56 = arith.constant 0 : index
    %c1_57 = arith.constant 1 : index
    %c0_58 = arith.constant 0 : index
    %59 = vector.load %arg2[%c0_56, %c1_57, %c0_58] : memref<8x4x2xf32, #tpu.memory_space<vmem>>, vector<8x1x2xf32>
    %60 = vector.shape_cast %59 : vector<8x1x2xf32> to vector<8x2xf32>
    %c0_59 = arith.constant 0 : index
    %c2_60 = arith.constant 2 : index
    %c0_61 = arith.constant 0 : index
    %61 = vector.load %arg2[%c0_59, %c2_60, %c0_61] : memref<8x4x2xf32, #tpu.memory_space<vmem>>, vector<8x1x2xf32>
    %62 = vector.shape_cast %61 : vector<8x1x2xf32> to vector<8x2xf32>
    %c0_62 = arith.constant 0 : index
    %c3 = arith.constant 3 : index
    %c0_63 = arith.constant 0 : index
    %63 = vector.load %arg2[%c0_62, %c3, %c0_63] : memref<8x4x2xf32, #tpu.memory_space<vmem>>, vector<8x1x2xf32>
    %64 = vector.shape_cast %63 : vector<8x1x2xf32> to vector<8x2xf32>
    %65 = tpu.concatenate %58, %60, %62, %64 in 0 : vector<8x2xf32>, vector<8x2xf32>, vector<8x2xf32>, vector<8x2xf32> -> vector<32x2xf32>
    %c0_64 = arith.constant 0 : index
    %c0_65 = arith.constant 0 : index
    %66 = vector.load %arg10[%c0_64, %c0_65] : memref<2x16xf32, #tpu.memory_space<vmem>>, vector<2x16xf32>
    %cst_66 = arith.constant dense<0.000000e+00> : vector<32x16xf32>
    %67 = tpu.matmul %65, %66, %cst_66 {dimension_numbers = #tpu.dot_dimension_numbers<[1], [0], [0], [1], [0, 0, 1, 1], [], []>} : vector<32x2xf32>, vector<2x16xf32>, vector<32x16xf32> -> vector<32x16xf32>
    %c0_67 = arith.constant 0 : index
    %c0_68 = arith.constant 0 : index
    %68 = vector.load %arg11[%c0_67, %c0_68] : memref<1x16xf32, #tpu.memory_space<vmem>>, vector<1x16xf32>
    %69 = vector.broadcast %68 : vector<1x16xf32> to vector<32x16xf32>
    %70 = arith.addf %67, %69 : vector<32x16xf32>
    %c0_69 = arith.constant 0 : index
    %c0_70 = arith.constant 0 : index
    %71 = vector.load %arg9[%c0_69, %c0_70] : memref<16x16xf32, #tpu.memory_space<vmem>>, vector<16x16xf32>
    %c0_71 = arith.constant 0 : index
    %c0_72 = arith.constant 0 : index
    %72 = vector.load %arg12[%c0_71, %c0_72] : memref<16x16xf32, #tpu.memory_space<vmem>>, vector<16x16xf32>
    %c0_73 = arith.constant 0 : index
    %c0_74 = arith.constant 0 : index
    %73 = vector.load %arg13[%c0_73, %c0_74] : memref<1x16xf32, #tpu.memory_space<vmem>>, vector<1x16xf32>
    %cst_75 = arith.constant dense<0.000000e+00> : vector<8x16xf32>
    %74 = tpu.matmul %56, %71, %cst_75 {dimension_numbers = #tpu.dot_dimension_numbers<[1], [0], [0], [1], [0, 0, 1, 1], [], []>} : vector<8x16xf32>, vector<16x16xf32>, vector<8x16xf32> -> vector<8x16xf32>
    %75 = vector.extract_strided_slice %70 {offsets = [0, 0], sizes = [8, 16], strides = [1, 1]} : vector<32x16xf32> to vector<8x16xf32>
    %76 = arith.addf %74, %75 : vector<8x16xf32>
    %cst_76 = arith.constant 0.000000e+00 : f32
    %77 = vector.broadcast %cst_76 : f32 to vector<8x16xf32>
    %78 = arith.maximumf %76, %77 : vector<8x16xf32>
    %cst_77 = arith.constant dense<0.000000e+00> : vector<8x16xf32>
    %79 = tpu.matmul %78, %72, %cst_77 {dimension_numbers = #tpu.dot_dimension_numbers<[1], [0], [0], [1], [0, 0, 1, 1], [], []>} : vector<8x16xf32>, vector<16x16xf32>, vector<8x16xf32> -> vector<8x16xf32>
    %80 = arith.addf %56, %79 : vector<8x16xf32>
    %81 = vector.broadcast %73 : vector<1x16xf32> to vector<8x16xf32>
    %82 = arith.addf %80, %81 : vector<8x16xf32>
    %cst_78 = arith.constant dense<0.000000e+00> : vector<8x16xf32>
    %83 = tpu.matmul %82, %71, %cst_78 {dimension_numbers = #tpu.dot_dimension_numbers<[1], [0], [0], [1], [0, 0, 1, 1], [], []>} : vector<8x16xf32>, vector<16x16xf32>, vector<8x16xf32> -> vector<8x16xf32>
    %84 = vector.extract_strided_slice %70 {offsets = [8, 0], sizes = [8, 16], strides = [1, 1]} : vector<32x16xf32> to vector<8x16xf32>
    %85 = arith.addf %83, %84 : vector<8x16xf32>
    %cst_79 = arith.constant 0.000000e+00 : f32
    %86 = vector.broadcast %cst_79 : f32 to vector<8x16xf32>
    %87 = arith.maximumf %85, %86 : vector<8x16xf32>
    %cst_80 = arith.constant dense<0.000000e+00> : vector<8x16xf32>
    %88 = tpu.matmul %87, %72, %cst_80 {dimension_numbers = #tpu.dot_dimension_numbers<[1], [0], [0], [1], [0, 0, 1, 1], [], []>} : vector<8x16xf32>, vector<16x16xf32>, vector<8x16xf32> -> vector<8x16xf32>
    %89 = arith.addf %82, %88 : vector<8x16xf32>
    %90 = vector.broadcast %73 : vector<1x16xf32> to vector<8x16xf32>
    %91 = arith.addf %89, %90 : vector<8x16xf32>
    %cst_81 = arith.constant dense<0.000000e+00> : vector<8x16xf32>
    %92 = tpu.matmul %91, %71, %cst_81 {dimension_numbers = #tpu.dot_dimension_numbers<[1], [0], [0], [1], [0, 0, 1, 1], [], []>} : vector<8x16xf32>, vector<16x16xf32>, vector<8x16xf32> -> vector<8x16xf32>
    %93 = vector.extract_strided_slice %70 {offsets = [16, 0], sizes = [8, 16], strides = [1, 1]} : vector<32x16xf32> to vector<8x16xf32>
    %94 = arith.addf %92, %93 : vector<8x16xf32>
    %cst_82 = arith.constant 0.000000e+00 : f32
    %95 = vector.broadcast %cst_82 : f32 to vector<8x16xf32>
    %96 = arith.maximumf %94, %95 : vector<8x16xf32>
    %cst_83 = arith.constant dense<0.000000e+00> : vector<8x16xf32>
    %97 = tpu.matmul %96, %72, %cst_83 {dimension_numbers = #tpu.dot_dimension_numbers<[1], [0], [0], [1], [0, 0, 1, 1], [], []>} : vector<8x16xf32>, vector<16x16xf32>, vector<8x16xf32> -> vector<8x16xf32>
    %98 = arith.addf %91, %97 : vector<8x16xf32>
    %99 = vector.broadcast %73 : vector<1x16xf32> to vector<8x16xf32>
    %100 = arith.addf %98, %99 : vector<8x16xf32>
    %cst_84 = arith.constant dense<0.000000e+00> : vector<8x16xf32>
    %101 = tpu.matmul %100, %71, %cst_84 {dimension_numbers = #tpu.dot_dimension_numbers<[1], [0], [0], [1], [0, 0, 1, 1], [], []>} : vector<8x16xf32>, vector<16x16xf32>, vector<8x16xf32> -> vector<8x16xf32>
    %102 = vector.extract_strided_slice %70 {offsets = [24, 0], sizes = [8, 16], strides = [1, 1]} : vector<32x16xf32> to vector<8x16xf32>
    %103 = arith.addf %101, %102 : vector<8x16xf32>
    %cst_85 = arith.constant 0.000000e+00 : f32
    %104 = vector.broadcast %cst_85 : f32 to vector<8x16xf32>
    %105 = arith.maximumf %103, %104 : vector<8x16xf32>
    %cst_86 = arith.constant dense<0.000000e+00> : vector<8x16xf32>
    %106 = tpu.matmul %105, %72, %cst_86 {dimension_numbers = #tpu.dot_dimension_numbers<[1], [0], [0], [1], [0, 0, 1, 1], [], []>} : vector<8x16xf32>, vector<16x16xf32>, vector<8x16xf32> -> vector<8x16xf32>
    %107 = arith.addf %100, %106 : vector<8x16xf32>
    %108 = vector.broadcast %73 : vector<1x16xf32> to vector<8x16xf32>
    %109 = arith.addf %107, %108 : vector<8x16xf32>
    %110 = tpu.concatenate %82, %91, %100, %109 in 0 : vector<8x16xf32>, vector<8x16xf32>, vector<8x16xf32>, vector<8x16xf32> -> vector<32x16xf32>
    %c0_87 = arith.constant 0 : index
    %c0_88 = arith.constant 0 : index
    %111 = vector.load %arg14[%c0_87, %c0_88] : memref<16x16xf32, #tpu.memory_space<vmem>>, vector<16x16xf32>
    %cst_89 = arith.constant dense<0.000000e+00> : vector<32x16xf32>
    %112 = tpu.matmul %110, %111, %cst_89 {dimension_numbers = #tpu.dot_dimension_numbers<[1], [0], [0], [1], [0, 0, 1, 1], [], []>} : vector<32x16xf32>, vector<16x16xf32>, vector<32x16xf32> -> vector<32x16xf32>
    %c0_90 = arith.constant 0 : index
    %c0_91 = arith.constant 0 : index
    %113 = vector.load %arg15[%c0_90, %c0_91] : memref<1x16xf32, #tpu.memory_space<vmem>>, vector<1x16xf32>
    %114 = vector.broadcast %113 : vector<1x16xf32> to vector<32x16xf32>
    %115 = arith.addf %112, %114 : vector<32x16xf32>
    %cst_92 = arith.constant 0.000000e+00 : f32
    %116 = vector.broadcast %cst_92 : f32 to vector<32x16xf32>
    %117 = arith.maximumf %115, %116 : vector<32x16xf32>
    %c0_93 = arith.constant 0 : index
    %c0_94 = arith.constant 0 : index
    %118 = vector.load %arg16[%c0_93, %c0_94] : memref<16x128xf32, #tpu.memory_space<vmem>>, vector<16x128xf32>
    %cst_95 = arith.constant dense<0.000000e+00> : vector<32x128xf32>
    %119 = tpu.matmul %117, %118, %cst_95 {dimension_numbers = #tpu.dot_dimension_numbers<[1], [0], [0], [1], [0, 0, 1, 1], [], []>} : vector<32x16xf32>, vector<16x128xf32>, vector<32x128xf32> -> vector<32x128xf32>
    %c0_96 = arith.constant 0 : index
    %c0_97 = arith.constant 0 : index
    %120 = vector.load %arg17[%c0_96, %c0_97] : memref<1x128xf32, #tpu.memory_space<vmem>>, vector<1x128xf32>
    %121 = vector.broadcast %120 : vector<1x128xf32> to vector<32x128xf32>
    %122 = arith.addf %119, %121 : vector<32x128xf32>
    %123 = vector.shape_cast %122 : vector<32x128xf32> to vector<4x8x128xf32>
    %c0_98 = arith.constant 0 : index
    %c0_99 = arith.constant 0 : index
    %c0_100 = arith.constant 0 : index
    %124 = vector.load %arg18[%c0_98, %c0_99, %c0_100] : memref<4x8x128xf32, #tpu.memory_space<vmem>>, vector<4x8x128xf32>
    tpu.vector_store %arg18[%c0_98, %c0_99, %c0_100], %123 {strides = array<i32>} : memref<4x8x128xf32, #tpu.memory_space<vmem>>, vector<4x8x128xf32>,
    return
  }
  func.func @transform_0(%arg0: i32) -> (i32, i32, i32) {
    %c0_i32 = arith.constant 0 : i32
    %c0_i32_0 = arith.constant 0 : i32
    %c0_i32_1 = arith.constant 0 : i32
    return %arg0, %c0_i32, %c0_i32_0 : i32, i32, i32
  }
  func.func @transform_1(%arg0: i32) -> (i32, i32, i32) {
    %c0_i32 = arith.constant 0 : i32
    %c0_i32_0 = arith.constant 0 : i32
    %c0_i32_1 = arith.constant 0 : i32
    return %arg0, %c0_i32, %c0_i32_0 : i32, i32, i32
  }
  func.func @transform_2(%arg0: i32) -> (i32, i32) {
    %c0_i32 = arith.constant 0 : i32
    %c0_i32_0 = arith.constant 0 : i32
    %c0_i32_1 = arith.constant 0 : i32
    return %c0_i32, %c0_i32_0 : i32, i32
  }
  func.func @transform_3(%arg0: i32) -> (i32, i32) {
    %c0_i32 = arith.constant 0 : i32
    %c0_i32_0 = arith.constant 0 : i32
    %c0_i32_1 = arith.constant 0 : i32
    return %c0_i32, %c0_i32_0 : i32, i32
  }
  func.func @transform_4(%arg0: i32) -> (i32, i32) {
    %c0_i32 = arith.constant 0 : i32
    %c0_i32_0 = arith.constant 0 : i32
    %c0_i32_1 = arith.constant 0 : i32
    return %c0_i32, %c0_i32_0 : i32, i32
  }
  func.func @transform_5(%arg0: i32) -> (i32, i32) {
    %c0_i32 = arith.constant 0 : i32
    %c0_i32_0 = arith.constant 0 : i32
    %c0_i32_1 = arith.constant 0 : i32
    return %c0_i32, %c0_i32_0 : i32, i32
  }
  func.func @transform_6(%arg0: i32) -> (i32, i32) {
    %c0_i32 = arith.constant 0 : i32
    %c0_i32_0 = arith.constant 0 : i32
    %c0_i32_1 = arith.constant 0 : i32
    return %c0_i32, %c0_i32_0 : i32, i32
  }
  func.func @transform_7(%arg0: i32) -> (i32, i32) {
    %c0_i32 = arith.constant 0 : i32
    %c0_i32_0 = arith.constant 0 : i32
    %c0_i32_1 = arith.constant 0 : i32
    return %c0_i32, %c0_i32_0 : i32, i32
  }
  func.func @transform_8(%arg0: i32) -> (i32, i32) {
    %c0_i32 = arith.constant 0 : i32
    %c0_i32_0 = arith.constant 0 : i32
    %c0_i32_1 = arith.constant 0 : i32
    return %c0_i32, %c0_i32_0 : i32, i32
  }
  func.func @transform_9(%arg0: i32) -> (i32, i32) {
    %c0_i32 = arith.constant 0 : i32
    %c0_i32_0 = arith.constant 0 : i32
    %c0_i32_1 = arith.constant 0 : i32
    return %c0_i32, %c0_i32_0 : i32, i32
  }
  func.func @transform_10(%arg0: i32) -> (i32, i32) {
    %c0_i32 = arith.constant 0 : i32
    %c0_i32_0 = arith.constant 0 : i32
    %c0_i32_1 = arith.constant 0 : i32
    return %c0_i32, %c0_i32_0 : i32, i32
  }
  func.func @transform_11(%arg0: i32) -> (i32, i32) {
    %c0_i32 = arith.constant 0 : i32
    %c0_i32_0 = arith.constant 0 : i32
    %c0_i32_1 = arith.constant 0 : i32
    return %c0_i32, %c0_i32_0 : i32, i32
  }
  func.func @transform_12(%arg0: i32) -> (i32, i32) {
    %c0_i32 = arith.constant 0 : i32
    %c0_i32_0 = arith.constant 0 : i32
    %c0_i32_1 = arith.constant 0 : i32
    return %c0_i32, %c0_i32_0 : i32, i32
  }
  func.func @transform_13(%arg0: i32) -> (i32, i32) {
    %c0_i32 = arith.constant 0 : i32
    %c0_i32_0 = arith.constant 0 : i32
    %c0_i32_1 = arith.constant 0 : i32
    return %c0_i32, %c0_i32_0 : i32, i32
  }
  func.func @transform_14(%arg0: i32) -> (i32, i32) {
    %c0_i32 = arith.constant 0 : i32
    %c0_i32_0 = arith.constant 0 : i32
    %c0_i32_1 = arith.constant 0 : i32
    return %c0_i32, %c0_i32_0 : i32, i32
  }
  func.func @transform_15(%arg0: i32) -> (i32, i32) {
    %c0_i32 = arith.constant 0 : i32
    %c0_i32_0 = arith.constant 0 : i32
    %c0_i32_1 = arith.constant 0 : i32
    return %c0_i32, %c0_i32_0 : i32, i32
  }
  func.func @transform_16(%arg0: i32) -> (i32, i32) {
    %c0_i32 = arith.constant 0 : i32
    %c0_i32_0 = arith.constant 0 : i32
    %c0_i32_1 = arith.constant 0 : i32
    return %c0_i32, %c0_i32_0 : i32, i32
  }
  func.func @transform_17(%arg0: i32) -> (i32, i32, i32) {
    %c0_i32 = arith.constant 0 : i32
    %c0_i32_0 = arith.constant 0 : i32
    %c0_i32_1 = arith.constant 0 : i32
    return %c0_i32, %arg0, %c0_i32_0 : i32, i32, i32
  }
}

</mosaic_0001>

<llo_original>
// kernel: nlds_forward.1
$region0: #{nlds_forward.1}
  #allocation0 [shape = 'u32[]', space=smem, size = 0x4, offset = 0x4, fixed_abs, tag = 'smem constant byte address 0x4 - core index']
  #allocation1 [shape = 'u32[144,128]{1,0:T(1,128)}', space=vmem, size = 0x12000, scoped, tag = 'internal scratch']
  #allocation2 [shape = 'f32[8,10,5]{2,1,0:T(8,128)}', space=vmem, size = 0x10000, scoped, tag = 'scratch operand']
  #allocation3 [shape = 'f32[8,10,8]{2,1,0:T(8,128)}', space=vmem, size = 0x10000, scoped, tag = 'scratch operand']
  %s0 = inlined_call_operand.vmem [shape: f32[8,8,5], index: 0, kind: input, shape index: {}]
  %s1 = inlined_call_operand.vmem [shape: f32[8,4,2], index: 1, kind: input, shape index: {}]
  %s2 = inlined_call_operand.vmem [shape: f32[15,8], index: 2, kind: input, shape index: {}]
  %s3 = inlined_call_operand.vmem [shape: f32[1,8], index: 3, kind: input, shape index: {}]
  %s4 = inlined_call_operand.vmem [shape: f32[24,8], index: 4, kind: input, shape index: {}]
  %s5 = inlined_call_operand.vmem [shape: f32[1,8], index: 5, kind: input, shape index: {}]
  %s6 = inlined_call_operand.vmem [shape: f32[64,16], index: 6, kind: input, shape index: {}]
  %s7 = inlined_call_operand.vmem [shape: f32[1,16], index: 7, kind: input, shape index: {}]
  %s8 = inlined_call_operand.vmem [shape: f32[16,16], index: 8, kind: input, shape index: {}]
  %s9 = inlined_call_operand.vmem [shape: f32[2,16], index: 9, kind: input, shape index: {}]
  %s10 = inlined_call_operand.vmem [shape: f32[1,16], index: 10, kind: input, shape index: {}]
  %s11 = inlined_call_operand.vmem [shape: f32[16,16], index: 11, kind: input, shape index: {}]
  %s12 = inlined_call_operand.vmem [shape: f32[1,16], index: 12, kind: input, shape index: {}]
  %s13 = inlined_call_operand.vmem [shape: f32[16,16], index: 13, kind: input, shape index: {}]
  %s14 = inlined_call_operand.vmem [shape: f32[1,16], index: 14, kind: input, shape index: {}]
  %s15 = inlined_call_operand.vmem [shape: f32[16,128], index: 15, kind: input, shape index: {}]
  %s16 = inlined_call_operand.vmem [shape: f32[1,128], index: 16, kind: input, shape index: {}]
  %s17 = inlined_call_operand.vmem [shape: f32[4,8,128], index: 17, kind: output, shape index: {}]
  %s18 = sld [smem:[#allocation0]]
  $region78: #{nlds_forward.1} parent=0
    _
  %s20 = ssub.s32 1, %s18
  %s21 = scalar_select 0, %s20, %s18
  // Predicated region
  $region2: #{nlds_forward.1} parent=0 // pred_check
    _
  $region3: #{nlds_forward.1} parent=0 // pred_check_branch
    %23 = sbr.rel (0) target = $region5
  $region4: #{nlds_forward.1} parent=0 // pred_region
    _
  $region5: #{nlds_forward.1} parent=0 // pred_fallthru
    _
  // Predicated region
  $region6: #{nlds_forward.1} parent=0 // pred_check
    _
  $region7: #{nlds_forward.1} parent=0 // pred_check_branch
    %25 = sbr.rel (0) target = $region9
  $region8: #{nlds_forward.1} parent=0 // pred_region
    _
  $region9: #{nlds_forward.1} parent=0 // pred_fallthru
    _
  // Predicated region
  $region10: #{nlds_forward.1} parent=0 // pred_check
    _
  $region11: #{nlds_forward.1} parent=0 // pred_check_branch
    %27 = sbr.rel (0) target = $region13
  $region12: #{nlds_forward.1} parent=0 // pred_region
    _
  $region13: #{nlds_forward.1} parent=0 // pred_fallthru
    _
  // Predicated region
  $region14: #{nlds_forward.1} parent=0 // pred_check
    _
  $region15: #{nlds_forward.1} parent=0 // pred_check_branch
    %29 = sbr.rel (0) target = $region17
  $region16: #{nlds_forward.1} parent=0 // pred_region
    _
  $region17: #{nlds_forward.1} parent=0 // pred_fallthru
    _
  // Predicated region
  $region18: #{nlds_forward.1} parent=0 // pred_check
    _
  $region19: #{nlds_forward.1} parent=0 // pred_check_branch
    %31 = sbr.rel (0) target = $region21
  $region20: #{nlds_forward.1} parent=0 // pred_region
    _
  $region21: #{nlds_forward.1} parent=0 // pred_fallthru
    _
  // Predicated region
  $region22: #{nlds_forward.1} parent=0 // pred_check
    _
  $region23: #{nlds_forward.1} parent=0 // pred_check_branch
    %33 = sbr.rel (0) target = $region25
  $region24: #{nlds_forward.1} parent=0 // pred_region
    _
  $region25: #{nlds_forward.1} parent=0 // pred_fallthru
    _
  // Predicated region
  $region26: #{nlds_forward.1} parent=0 // pred_check
    _
  $region27: #{nlds_forward.1} parent=0 // pred_check_branch
    %35 = sbr.rel (0) target = $region29
  $region28: #{nlds_forward.1} parent=0 // pred_region
    _
  $region29: #{nlds_forward.1} parent=0 // pred_fallthru
    _
  // Predicated region
  $region30: #{nlds_forward.1} parent=0 // pred_check
    _
  $region31: #{nlds_forward.1} parent=0 // pred_check_branch
    %37 = sbr.rel (0) target = $region33
  $region32: #{nlds_forward.1} parent=0 // pred_region
    _
  $region33: #{nlds_forward.1} parent=0 // pred_fallthru
    _
  // Predicated region
  $region34: #{nlds_forward.1} parent=0 // pred_check
    _
  $region35: #{nlds_forward.1} parent=0 // pred_check_branch
    %39 = sbr.rel (0) target = $region37
  $region36: #{nlds_forward.1} parent=0 // pred_region
    _
  $region37: #{nlds_forward.1} parent=0 // pred_fallthru
    _
  // Predicated region
  $region38: #{nlds_forward.1} parent=0 // pred_check
    _
  $region39: #{nlds_forward.1} parent=0 // pred_check_branch
    %41 = sbr.rel (0) target = $region41
  $region40: #{nlds_forward.1} parent=0 // pred_region
    _
  $region41: #{nlds_forward.1} parent=0 // pred_fallthru
    _
  // Predicated region
  $region42: #{nlds_forward.1} parent=0 // pred_check
    _
  $region43: #{nlds_forward.1} parent=0 // pred_check_branch
    %43 = sbr.rel (0) target = $region45
  $region44: #{nlds_forward.1} parent=0 // pred_region
    _
  $region45: #{nlds_forward.1} parent=0 // pred_fallthru
    _
  // Predicated region
  $region46: #{nlds_forward.1} parent=0 // pred_check
    _
  $region47: #{nlds_forward.1} parent=0 // pred_check_branch
    %45 = sbr.rel (0) target = $region49
  $region48: #{nlds_forward.1} parent=0 // pred_region
    _
  $region49: #{nlds_forward.1} parent=0 // pred_fallthru
    _
  // Predicated region
  $region50: #{nlds_forward.1} parent=0 // pred_check
    _
  $region51: #{nlds_forward.1} parent=0 // pred_check_branch
    %47 = sbr.rel (0) target = $region53
  $region52: #{nlds_forward.1} parent=0 // pred_region
    _
  $region53: #{nlds_forward.1} parent=0 // pred_fallthru
    _
  // Predicated region
  $region54: #{nlds_forward.1} parent=0 // pred_check
    _
  $region55: #{nlds_forward.1} parent=0 // pred_check_branch
    %49 = sbr.rel (0) target = $region57
  $region56: #{nlds_forward.1} parent=0 // pred_region
    _
  $region57: #{nlds_forward.1} parent=0 // pred_fallthru
    _
  // Predicated region
  $region58: #{nlds_forward.1} parent=0 // pred_check
    _
  $region59: #{nlds_forward.1} parent=0 // pred_check_branch
    %51 = sbr.rel (0) target = $region61
  $region60: #{nlds_forward.1} parent=0 // pred_region
    _
  $region61: #{nlds_forward.1} parent=0 // pred_fallthru
    _
  // Predicated region
  $region62: #{nlds_forward.1} parent=0 // pred_check
    _
  $region63: #{nlds_forward.1} parent=0 // pred_check_branch
    %53 = sbr.rel (0) target = $region65
  $region64: #{nlds_forward.1} parent=0 // pred_region
    _
  $region65: #{nlds_forward.1} parent=0 // pred_fallthru
    _
  // Predicated region
  $region66: #{nlds_forward.1} parent=0 // pred_check
    _
  $region67: #{nlds_forward.1} parent=0 // pred_check_branch
    %55 = sbr.rel (0) target = $region69
  $region68: #{nlds_forward.1} parent=0 // pred_region
    _
  $region69: #{nlds_forward.1} parent=0 // pred_fallthru
    _
  %v56 = vld [vmem:[%s0] sm:$0xff]
  %v57 = vld [vmem:[%s0 + $0x8] sm:$0xff]
  %v58 = vld [vmem:[%s0 + $0x10] sm:$0xff]
  %v59 = vld [vmem:[%s0 + $0x18] sm:$0xff]
  %v60 = vld [vmem:[%s0 + $0x20] sm:$0xff]
  %v61 = vld [vmem:[%s0 + $0x28] sm:$0xff]
  %v62 = vld [vmem:[%s0 + $0x30] sm:$0xff]
  %v63 = vld [vmem:[%s0 + $0x38] sm:$0xff]
  %vm64 = vcmask 32768
  %65 = vst.msk [vmem:[#allocation2] sm:$0x1] %vm64, 0.0
  %66 = vst.msk [vmem:[#allocation2 + $0x10] sm:$0x1] %vm64, 0.0
  %67 = vst.msk [vmem:[#allocation2 + $0x20] sm:$0x1] %vm64, 0.0
  %68 = vst.msk [vmem:[#allocation2 + $0x30] sm:$0x1] %vm64, 0.0
  %69 = vst.msk [vmem:[#allocation2 + $0x40] sm:$0x1] %vm64, 0.0
  %70 = vst.msk [vmem:[#allocation2 + $0x50] sm:$0x1] %vm64, 0.0
  %71 = vst.msk [vmem:[#allocation2 + $0x60] sm:$0x1] %vm64, 0.0
  %72 = vst.msk [vmem:[#allocation2 + $0x70] sm:$0x1] %vm64, 0.0
  %73 = vst.msk [vmem:[#allocation2 + $0x9] sm:$0x1] %vm64, 0.0
  %74 = vst.msk [vmem:[#allocation2 + $0x19] sm:$0x1] %vm64, 0.0
  %75 = vst.msk [vmem:[#allocation2 + $0x29] sm:$0x1] %vm64, 0.0
  %76 = vst.msk [vmem:[#allocation2 + $0x39] sm:$0x1] %vm64, 0.0
  %77 = vst.msk [vmem:[#allocation2 + $0x49] sm:$0x1] %vm64, 0.0
  %78 = vst.msk [vmem:[#allocation2 + $0x59] sm:$0x1] %vm64, 0.0
  %79 = vst.msk [vmem:[#allocation2 + $0x69] sm:$0x1] %vm64, 0.0
  %80 = vst.msk [vmem:[#allocation2 + $0x79] sm:$0x1] %vm64, 0.0
  %vm81 = vcmask 39936
  %82 = vst.msk [vmem:[#allocation2 + $0x1] sm:$0xff] %vm81, %v56
  %83 = vst.msk [vmem:[#allocation2 + $0x11] sm:$0xff] %vm81, %v57
  %84 = vst.msk [vmem:[#allocation2 + $0x21] sm:$0xff] %vm81, %v58
  %85 = vst.msk [vmem:[#allocation2 + $0x31] sm:$0xff] %vm81, %v59
  %86 = vst.msk [vmem:[#allocation2 + $0x41] sm:$0xff] %vm81, %v60
  %87 = vst.msk [vmem:[#allocation2 + $0x51] sm:$0xff] %vm81, %v61
  %88 = vst.msk [vmem:[#allocation2 + $0x61] sm:$0xff] %vm81, %v62
  %89 = vst.msk [vmem:[#allocation2 + $0x71] sm:$0xff] %vm81, %v63
  %v90 = vld [vmem:[#allocation2] sm:$0xff]
  %v91 = vld [vmem:[#allocation2 + $0x10] sm:$0xff]
  %v92 = vld [vmem:[#allocation2 + $0x20] sm:$0xff]
  %v93 = vld [vmem:[#allocation2 + $0x30] sm:$0xff]
  %v94 = vld [vmem:[#allocation2 + $0x40] sm:$0xff]
  %v95 = vld [vmem:[#allocation2 + $0x50] sm:$0xff]
  %v96 = vld [vmem:[#allocation2 + $0x60] sm:$0xff]
  %v97 = vld [vmem:[#allocation2 + $0x70] sm:$0xff]
  %v98 = vld [vmem:[#allocation2 + $0x1] sm:$0xff]
  %v99 = vld [vmem:[#allocation2 + $0x11] sm:$0xff]
  %v100 = vld [vmem:[#allocation2 + $0x21] sm:$0xff]
  %v101 = vld [vmem:[#allocation2 + $0x31] sm:$0xff]
  %v102 = vld [vmem:[#allocation2 + $0x41] sm:$0xff]
  %v103 = vld [vmem:[#allocation2 + $0x51] sm:$0xff]
  %v104 = vld [vmem:[#allocation2 + $0x61] sm:$0xff]
  %v105 = vld [vmem:[#allocation2 + $0x71] sm:$0xff]
  %v106 = vld [vmem:[#allocation2 + $0x2] sm:$0xff]
  %v107 = vld [vmem:[#allocation2 + $0x12] sm:$0xff]
  %v108 = vld [vmem:[#allocation2 + $0x22] sm:$0xff]
  %v109 = vld [vmem:[#allocation2 + $0x32] sm:$0xff]
  %v110 = vld [vmem:[#allocation2 + $0x42] sm:$0xff]
  %v111 = vld [vmem:[#allocation2 + $0x52] sm:$0xff]
  %v112 = vld [vmem:[#allocation2 + $0x62] sm:$0xff]
  %v113 = vld [vmem:[#allocation2 + $0x72] sm:$0xff]
  %122 = vrot.lane.b32.xlu0 %v98, 5
  %v123 = vpop.permute.xlu0 %122
  %124 = vrot.lane.b32.xlu0 %v99, 5
  %v125 = vpop.permute.xlu0 %124
  %126 = vrot.lane.b32.xlu0 %v100, 5
  %v127 = vpop.permute.xlu0 %126
  %128 = vrot.lane.b32.xlu0 %v101, 5
  %v129 = vpop.permute.xlu0 %128
  %130 = vrot.lane.b32.xlu0 %v102, 5
  %v131 = vpop.permute.xlu0 %130
  %132 = vrot.lane.b32.xlu0 %v103, 5
  %v133 = vpop.permute.xlu0 %132
  %134 = vrot.lane.b32.xlu0 %v104, 5
  %v135 = vpop.permute.xlu0 %134
  %136 = vrot.lane.b32.xlu0 %v105, 5
  %v137 = vpop.permute.xlu0 %136
  %154 = vrot.lane.b32.xlu0 %v106, 10
  %v155 = vpop.permute.xlu0 %154
  %156 = vrot.lane.b32.xlu0 %v107, 10
  %v157 = vpop.permute.xlu0 %156
  %158 = vrot.lane.b32.xlu0 %v108, 10
  %v159 = vpop.permute.xlu0 %158
  %160 = vrot.lane.b32.xlu0 %v109, 10
  %v161 = vpop.permute.xlu0 %160
  %162 = vrot.lane.b32.xlu0 %v110, 10
  %v163 = vpop.permute.xlu0 %162
  %164 = vrot.lane.b32.xlu0 %v111, 10
  %v165 = vpop.permute.xlu0 %164
  %166 = vrot.lane.b32.xlu0 %v112, 10
  %v167 = vpop.permute.xlu0 %166
  %168 = vrot.lane.b32.xlu0 %v113, 10
  %v169 = vpop.permute.xlu0 %168
  %v178 = vsel %vm81, %v90, %v123
  %v179 = vsel %vm81, %v91, %v125
  %v180 = vsel %vm81, %v92, %v127
  %v181 = vsel %vm81, %v93, %v129
  %v182 = vsel %vm81, %v94, %v131
  %v183 = vsel %vm81, %v95, %v133
  %v184 = vsel %vm81, %v96, %v135
  %v185 = vsel %vm81, %v97, %v137
  %vm186 = vcmask 80896
  %v187 = vsel %vm186, %v178, %v155
  %v188 = vsel %vm186, %v179, %v157
  %v189 = vsel %vm186, %v180, %v159
  %v190 = vsel %vm186, %v181, %v161
  %v191 = vsel %vm186, %v182, %v163
  %v192 = vsel %vm186, %v183, %v165
  %v193 = vsel %vm186, %v184, %v167
  %v194 = vsel %vm186, %v185, %v169
  %v195 = vld [vmem:[%s2] sm:$0xff]
  %v196 = vld [vmem:[%s2 + $0x8] sm:$0x7f]
  %v197 = vld [vmem:[%s3] sm:$0x1]
  %v199 = vlaneseq
  %v200 = vshrl.u32 %v199, 7
  %v201 = vsub.s32 0, %v200
  %v202 = vrot.slane %v197, %v201
  %vm204 = vcmask 121856
  %v206 = vsel %vm204, %v187, 0
  %v209 = vsel %vm204, %v188, 0
  %v212 = vsel %vm204, %v189, 0
  %v215 = vsel %vm204, %v190, 0
  %v218 = vsel %vm204, %v191, 0
  %v221 = vsel %vm204, %v192, 0
  %v224 = vsel %vm204, %v193, 0
  %v227 = vsel %vm204, %v194, 0
  %vm229 = vcmask 1046528
  %v231 = vsel %vm229, %v196, 0
  %233 = vmatprep.subr.mxu0 0.0
  %234 = vmatpush1.msra.mxu0 %v195
  %235 = vmatprep.subr.mxu0 0.0
  %236 = vmatpush1.msra.mxu0 %v231
  %237 = vmatprep.subr.mxu0 0.0
  %238 = vmatpush1.msra.mxu0 0.0
  %239 = vmatprep.subr.mxu0 0.0
  %240 = vmatpush1.msra.mxu0 0.0
  %241 = vmatprep.subr.mxu0 0.0
  %242 = vmatpush1.msra.mxu0 0.0
  %243 = vmatprep.subr.mxu0 0.0
  %244 = vmatpush1.msra.mxu0 0.0
  %245 = vmatprep.subr.mxu0 0.0
  %246 = vmatpush1.msra.mxu0 0.0
  %247 = vmatprep.subr.mxu0 0.0
  %248 = vmatpush1.msra.mxu0 0.0
  %249 = vmatprep.subr.mxu0 0.0
  %250 = vmatpush1.msra.mxu0 0.0
  %251 = vmatprep.subr.mxu0 0.0
  %252 = vmatpush1.msra.mxu0 0.0
  %253 = vmatprep.subr.mxu0 0.0
  %254 = vmatpush1.msra.mxu0 0.0
  %255 = vmatprep.subr.mxu0 0.0
  %256 = vmatpush1.msra.mxu0 0.0
  %257 = vmatprep.subr.mxu0 0.0
  %258 = vmatpush1.msra.mxu0 0.0
  %259 = vmatprep.subr.mxu0 0.0
  %260 = vmatpush1.msra.mxu0 0.0
  %261 = vmatprep.subr.mxu0 0.0
  %262 = vmatpush1.msra.mxu0 0.0
  %263 = vmatprep.subr.mxu0 0.0
  %264 = vmatpush1.msra.mxu0 0.0
  %265 = vmatprep.subr.mxu0 0.0
  %266 = vmatpush1.msra.mxu0 0.0
  %267 = vmatprep.subr.mxu0 0.0
  %268 = vmatpush1.msra.mxu0 0.0
  %269 = vmatprep.subr.mxu0 0.0
  %270 = vmatpush1.msra.mxu0 0.0
  %271 = vmatprep.subr.mxu0 0.0
  %272 = vmatpush1.msra.mxu0 0.0
  %273 = vmatprep.subr.mxu0 0.0
  %274 = vmatpush1.msra.mxu0 0.0
  %275 = vmatprep.subr.mxu0 0.0
  %276 = vmatpush1.msra.mxu0 0.0
  %277 = vmatprep.subr.mxu0 0.0
  %278 = vmatpush1.msra.mxu0 0.0
  %279 = vmatprep.subr.mxu0 0.0
  %280 = vmatpush1.msra.mxu0 0.0
  %281 = vmatprep.subr.mxu0 0.0
  %282 = vmatpush1.msra.mxu0 0.0
  %283 = vmatprep.subr.mxu0 0.0
  %284 = vmatpush1.msra.mxu0 0.0
  %285 = vmatprep.subr.mxu0 0.0
  %286 = vmatpush1.msra.mxu0 0.0
  %287 = vmatprep.subr.mxu0 0.0
  %288 = vmatpush1.msra.mxu0 0.0
  %289 = vmatprep.subr.mxu0 0.0
  %290 = vmatpush1.msra.mxu0 0.0
  %291 = vmatprep.subr.mxu0 0.0
  %292 = vmatpush1.msra.mxu0 0.0
  %293 = vmatprep.subr.mxu0 0.0
  %294 = vmatpush1.msra.mxu0 0.0
  %295 = vmatprep.subr.mxu0 0.0
  %296 = vmatpush1.msra.mxu0 0.0
  %297 = vmatprep.mubr.f32.mxu0 0.0
  %298 = vmatmul.mubr.f32.gmra.mrb[0].mxu0 %v206
  %v299 = vpop.f32.mrb[0].mxu0
  %v300 = vadd.f32 %v202, %v299
  %v301 = vpop.f32.mrb[0].mxu0
  %302 = vmatprep.mubr.f32.mxu0 0.0
  %303 = vmatmul.mubr.f32.gmra.mrb[0].mxu0 %v209
  %v304 = vpop.f32.mrb[0].mxu0
  %v305 = vadd.f32 %v202, %v304
  %v306 = vpop.f32.mrb[0].mxu0
  %307 = vmatprep.mubr.f32.mxu0 0.0
  %308 = vmatmul.mubr.f32.gmra.mrb[0].mxu0 %v212
  %v309 = vpop.f32.mrb[0].mxu0
  %v310 = vadd.f32 %v202, %v309
  %v311 = vpop.f32.mrb[0].mxu0
  %312 = vmatprep.mubr.f32.mxu0 0.0
  %313 = vmatmul.mubr.f32.gmra.mrb[0].mxu0 %v215
  %v314 = vpop.f32.mrb[0].mxu0
  %v315 = vadd.f32 %v202, %v314
  %v316 = vpop.f32.mrb[0].mxu0
  %317 = vmatprep.mubr.f32.mxu0 0.0
  %318 = vmatmul.mubr.f32.gmra.mrb[0].mxu0 %v218
  %v319 = vpop.f32.mrb[0].mxu0
  %v320 = vadd.f32 %v202, %v319
  %v321 = vpop.f32.mrb[0].mxu0
  %322 = vmatprep.mubr.f32.mxu0 0.0
  %323 = vmatmul.mubr.f32.gmra.mrb[0].mxu0 %v221
  %v324 = vpop.f32.mrb[0].mxu0
  %v325 = vadd.f32 %v202, %v324
  %v326 = vpop.f32.mrb[0].mxu0
  %327 = vmatprep.mubr.f32.mxu0 0.0
  %328 = vmatmul.mubr.f32.gmra.mrb[0].mxu0 %v224
  %v329 = vpop.f32.mrb[0].mxu0
  %v330 = vadd.f32 %v202, %v329
  %v331 = vpop.f32.mrb[0].mxu0
  %332 = vmatprep.mubr.f32.mxu0 0.0
  %333 = vmatmul.mubr.f32.gmra.mrb[0].mxu0 %v227
  %v334 = vpop.f32.mrb[0].mxu0
  %v335 = vadd.f32 %v202, %v334
  %v336 = vpop.f32.mrb[0].mxu0
  %337 = vdwg.mxu0
  %v338 = vmax.f32 %v300, 0.0
  %v339 = vmax.f32 %v305, 0.0
  %v340 = vmax.f32 %v310, 0.0
  %v341 = vmax.f32 %v315, 0.0
  %v342 = vmax.f32 %v320, 0.0
  %v343 = vmax.f32 %v325, 0.0
  %v344 = vmax.f32 %v330, 0.0
  %v345 = vmax.f32 %v335, 0.0
  %vm346 = vcmask 57344
  %347 = vst.msk [vmem:[#allocation3] sm:$0x1] %vm346, 0.0
  %348 = vst.msk [vmem:[#allocation3 + $0x10] sm:$0x1] %vm346, 0.0
  %349 = vst.msk [vmem:[#allocation3 + $0x20] sm:$0x1] %vm346, 0.0
  %350 = vst.msk [vmem:[#allocation3 + $0x30] sm:$0x1] %vm346, 0.0
  %351 = vst.msk [vmem:[#allocation3 + $0x40] sm:$0x1] %vm346, 0.0
  %352 = vst.msk [vmem:[#allocation3 + $0x50] sm:$0x1] %vm346, 0.0
  %353 = vst.msk [vmem:[#allocation3 + $0x60] sm:$0x1] %vm346, 0.0
  %354 = vst.msk [vmem:[#allocation3 + $0x70] sm:$0x1] %vm346, 0.0
  %355 = vst.msk [vmem:[#allocation3 + $0x9] sm:$0x1] %vm346, 0.0
  %356 = vst.msk [vmem:[#allocation3 + $0x19] sm:$0x1] %vm346, 0.0
  %357 = vst.msk [vmem:[#allocation3 + $0x29] sm:$0x1] %vm346, 0.0
  %358 = vst.msk [vmem:[#allocation3 + $0x39] sm:$0x1] %vm346, 0.0
  %359 = vst.msk [vmem:[#allocation3 + $0x49] sm:$0x1] %vm346, 0.0
  %360 = vst.msk [vmem:[#allocation3 + $0x59] sm:$0x1] %vm346, 0.0
  %361 = vst.msk [vmem:[#allocation3 + $0x69] sm:$0x1] %vm346, 0.0
  %362 = vst.msk [vmem:[#allocation3 + $0x79] sm:$0x1] %vm346, 0.0
  %vm363 = vcmask 64512
  %364 = vst.msk [vmem:[#allocation3 + $0x1] sm:$0xff] %vm363, %v338
  %365 = vst.msk [vmem:[#allocation3 + $0x11] sm:$0xff] %vm363, %v339
  %366 = vst.msk [vmem:[#allocation3 + $0x21] sm:$0xff] %vm363, %v340
  %367 = vst.msk [vmem:[#allocation3 + $0x31] sm:$0xff] %vm363, %v341
  %368 = vst.msk [vmem:[#allocation3 + $0x41] sm:$0xff] %vm363, %v342
  %369 = vst.msk [vmem:[#allocation3 + $0x51] sm:$0xff] %vm363, %v343
  %370 = vst.msk [vmem:[#allocation3 + $0x61] sm:$0xff] %vm363, %v344
  %371 = vst.msk [vmem:[#allocation3 + $0x71] sm:$0xff] %vm363, %v345
  %v372 = vld [vmem:[#allocation3] sm:$0xff]
  %v373 = vld [vmem:[#allocation3 + $0x10] sm:$0xff]
  %v374 = vld [vmem:[#allocation3 + $0x20] sm:$0xff]
  %v375 = vld [vmem:[#allocation3 + $0x30] sm:$0xff]
  %v376 = vld [vmem:[#allocation3 + $0x40] sm:$0xff]
  %v377 = vld [vmem:[#allocation3 + $0x50] sm:$0xff]
  %v378 = vld [vmem:[#allocation3 + $0x60] sm:$0xff]
  %v379 = vld [vmem:[#allocation3 + $0x70] sm:$0xff]
  %v380 = vld [vmem:[#allocation3 + $0x1] sm:$0xff]
  %v381 = vld [vmem:[#allocation3 + $0x11] sm:$0xff]
  %v382 = vld [vmem:[#allocation3 + $0x21] sm:$0xff]
  %v383 = vld [vmem:[#allocation3 + $0x31] sm:$0xff]
  %v384 = vld [vmem:[#allocation3 + $0x41] sm:$0xff]
  %v385 = vld [vmem:[#allocation3 + $0x51] sm:$0xff]
  %v386 = vld [vmem:[#allocation3 + $0x61] sm:$0xff]
  %v387 = vld [vmem:[#allocation3 + $0x71] sm:$0xff]
  %v388 = vld [vmem:[#allocation3 + $0x2] sm:$0xff]
  %v389 = vld [vmem:[#allocation3 + $0x12] sm:$0xff]
  %v390 = vld [vmem:[#allocation3 + $0x22] sm:$0xff]
  %v391 = vld [vmem:[#allocation3 + $0x32] sm:$0xff]
  %v392 = vld [vmem:[#allocation3 + $0x42] sm:$0xff]
  %v393 = vld [vmem:[#allocation3 + $0x52] sm:$0xff]
  %v394 = vld [vmem:[#allocation3 + $0x62] sm:$0xff]
  %v395 = vld [vmem:[#allocation3 + $0x72] sm:$0xff]
  %404 = vrot.lane.b32.xlu0 %v380, 8
  %v405 = vpop.permute.xlu0 %404
  %406 = vrot.lane.b32.xlu0 %v381, 8
  %v407 = vpop.permute.xlu0 %406
  %408 = vrot.lane.b32.xlu0 %v382, 8
  %v409 = vpop.permute.xlu0 %408
  %410 = vrot.lane.b32.xlu0 %v383, 8
  %v411 = vpop.permute.xlu0 %410
  %412 = vrot.lane.b32.xlu0 %v384, 8
  %v413 = vpop.permute.xlu0 %412
  %414 = vrot.lane.b32.xlu0 %v385, 8
  %v415 = vpop.permute.xlu0 %414
  %416 = vrot.lane.b32.xlu0 %v386, 8
  %v417 = vpop.permute.xlu0 %416
  %418 = vrot.lane.b32.xlu0 %v387, 8
  %v419 = vpop.permute.xlu0 %418
  %436 = vrot.lane.b32.xlu0 %v388, 16
  %v437 = vpop.permute.xlu0 %436
  %438 = vrot.lane.b32.xlu0 %v389, 16
  %v439 = vpop.permute.xlu0 %438
  %440 = vrot.lane.b32.xlu0 %v390, 16
  %v441 = vpop.permute.xlu0 %440
  %442 = vrot.lane.b32.xlu0 %v391, 16
  %v443 = vpop.permute.xlu0 %442
  %444 = vrot.lane.b32.xlu0 %v392, 16
  %v445 = vpop.permute.xlu0 %444
  %446 = vrot.lane.b32.xlu0 %v393, 16
  %v447 = vpop.permute.xlu0 %446
  %448 = vrot.lane.b32.xlu0 %v394, 16
  %v449 = vpop.permute.xlu0 %448
  %450 = vrot.lane.b32.xlu0 %v395, 16
  %v451 = vpop.permute.xlu0 %450
  %v460 = vsel %vm363, %v372, %v405
  %v461 = vsel %vm363, %v373, %v407
  %v462 = vsel %vm363, %v374, %v409
  %v463 = vsel %vm363, %v375, %v411
  %v464 = vsel %vm363, %v376, %v413
  %v465 = vsel %vm363, %v377, %v415
  %v466 = vsel %vm363, %v378, %v417
  %v467 = vsel %vm363, %v379, %v419
  %vm468 = vcmask 130048
  %v469 = vsel %vm468, %v460, %v437
  %v470 = vsel %vm468, %v461, %v439
  %v471 = vsel %vm468, %v462, %v441
  %v472 = vsel %vm468, %v463, %v443
  %v473 = vsel %vm468, %v464, %v445
  %v474 = vsel %vm468, %v465, %v447
  %v475 = vsel %vm468, %v466, %v449
  %v476 = vsel %vm468, %v467, %v451
  %v477 = vld [vmem:[%s4] sm:$0xff]
  %v478 = vld [vmem:[%s4 + $0x8] sm:$0xff]
  %v479 = vld [vmem:[%s4 + $0x10] sm:$0xff]
  %v480 = vld [vmem:[%s5] sm:$0x1]
  %v482 = vlaneseq
  %v483 = vshrl.u32 %v482, 7
  %v484 = vsub.s32 0, %v483
  %v485 = vrot.slane %v480, %v484
  %vm487 = vcmask 195584
  %v489 = vsel %vm487, %v469, 0
  %v492 = vsel %vm487, %v470, 0
  %v495 = vsel %vm487, %v471, 0
  %v498 = vsel %vm487, %v472, 0
  %v501 = vsel %vm487, %v473, 0
  %v504 = vsel %vm487, %v474, 0
  %v507 = vsel %vm487, %v475, 0
  %v510 = vsel %vm487, %v476, 0
  %512 = vmatprep.subr.mxu0 0.0
  %513 = vmatpush1.msra.mxu0 %v477
  %514 = vmatprep.subr.mxu0 0.0
  %515 = vmatpush1.msra.mxu0 %v478
  %516 = vmatprep.subr.mxu0 0.0
  %517 = vmatpush1.msra.mxu0 %v479
  %518 = vmatprep.subr.mxu0 0.0
  %519 = vmatpush1.msra.mxu0 0.0
  %520 = vmatprep.subr.mxu0 0.0
  %521 = vmatpush1.msra.mxu0 0.0
  %522 = vmatprep.subr.mxu0 0.0
  %523 = vmatpush1.msra.mxu0 0.0
  %524 = vmatprep.subr.mxu0 0.0
  %525 = vmatpush1.msra.mxu0 0.0
  %526 = vmatprep.subr.mxu0 0.0
  %527 = vmatpush1.msra.mxu0 0.0
  %528 = vmatprep.subr.mxu0 0.0
  %529 = vmatpush1.msra.mxu0 0.0
  %530 = vmatprep.subr.mxu0 0.0
  %531 = vmatpush1.msra.mxu0 0.0
  %532 = vmatprep.subr.mxu0 0.0
  %533 = vmatpush1.msra.mxu0 0.0
  %534 = vmatprep.subr.mxu0 0.0
  %535 = vmatpush1.msra.mxu0 0.0
  %536 = vmatprep.subr.mxu0 0.0
  %537 = vmatpush1.msra.mxu0 0.0
  %538 = vmatprep.subr.mxu0 0.0
  %539 = vmatpush1.msra.mxu0 0.0
  %540 = vmatprep.subr.mxu0 0.0
  %541 = vmatpush1.msra.mxu0 0.0
  %542 = vmatprep.subr.mxu0 0.0
  %543 = vmatpush1.msra.mxu0 0.0
  %544 = vmatprep.subr.mxu0 0.0
  %545 = vmatpush1.msra.mxu0 0.0
  %546 = vmatprep.subr.mxu0 0.0
  %547 = vmatpush1.msra.mxu0 0.0
  %548 = vmatprep.subr.mxu0 0.0
  %549 = vmatpush1.msra.mxu0 0.0
  %550 = vmatprep.subr.mxu0 0.0
  %551 = vmatpush1.msra.mxu0 0.0
  %552 = vmatprep.subr.mxu0 0.0
  %553 = vmatpush1.msra.mxu0 0.0
  %554 = vmatprep.subr.mxu0 0.0
  %555 = vmatpush1.msra.mxu0 0.0
  %556 = vmatprep.subr.mxu0 0.0
  %557 = vmatpush1.msra.mxu0 0.0
  %558 = vmatprep.subr.mxu0 0.0
  %559 = vmatpush1.msra.mxu0 0.0
  %560 = vmatprep.subr.mxu0 0.0
  %561 = vmatpush1.msra.mxu0 0.0
  %562 = vmatprep.subr.mxu0 0.0
  %563 = vmatpush1.msra.mxu0 0.0
  %564 = vmatprep.subr.mxu0 0.0
  %565 = vmatpush1.msra.mxu0 0.0
  %566 = vmatprep.subr.mxu0 0.0
  %567 = vmatpush1.msra.mxu0 0.0
  %568 = vmatprep.subr.mxu0 0.0
  %569 = vmatpush1.msra.mxu0 0.0
  %570 = vmatprep.subr.mxu0 0.0
  %571 = vmatpush1.msra.mxu0 0.0
  %572 = vmatprep.subr.mxu0 0.0
  %573 = vmatpush1.msra.mxu0 0.0
  %574 = vmatprep.subr.mxu0 0.0
  %575 = vmatpush1.msra.mxu0 0.0
  %576 = vmatprep.mubr.f32.mxu0 0.0
  %577 = vmatmul.mubr.f32.gmra.mrb[0].mxu0 %v489
  %v578 = vpop.f32.mrb[0].mxu0
  %v579 = vadd.f32 %v485, %v578
  %v580 = vpop.f32.mrb[0].mxu0
  %581 = vmatprep.mubr.f32.mxu0 0.0
  %582 = vmatmul.mubr.f32.gmra.mrb[0].mxu0 %v492
  %v583 = vpop.f32.mrb[0].mxu0
  %v584 = vadd.f32 %v485, %v583
  %v585 = vpop.f32.mrb[0].mxu0
  %586 = vmatprep.mubr.f32.mxu0 0.0
  %587 = vmatmul.mubr.f32.gmra.mrb[0].mxu0 %v495
  %v588 = vpop.f32.mrb[0].mxu0
  %v589 = vadd.f32 %v485, %v588
  %v590 = vpop.f32.mrb[0].mxu0
  %591 = vmatprep.mubr.f32.mxu0 0.0
  %592 = vmatmul.mubr.f32.gmra.mrb[0].mxu0 %v498
  %v593 = vpop.f32.mrb[0].mxu0
  %v594 = vadd.f32 %v485, %v593
  %v595 = vpop.f32.mrb[0].mxu0
  %596 = vmatprep.mubr.f32.mxu0 0.0
  %597 = vmatmul.mubr.f32.gmra.mrb[0].mxu0 %v501
  %v598 = vpop.f32.mrb[0].mxu0
  %v599 = vadd.f32 %v485, %v598
  %v600 = vpop.f32.mrb[0].mxu0
  %601 = vmatprep.mubr.f32.mxu0 0.0
  %602 = vmatmul.mubr.f32.gmra.mrb[0].mxu0 %v504
  %v603 = vpop.f32.mrb[0].mxu0
  %v604 = vadd.f32 %v485, %v603
  %v605 = vpop.f32.mrb[0].mxu0
  %606 = vmatprep.mubr.f32.mxu0 0.0
  %607 = vmatmul.mubr.f32.gmra.mrb[0].mxu0 %v507
  %v608 = vpop.f32.mrb[0].mxu0
  %v609 = vadd.f32 %v485, %v608
  %v610 = vpop.f32.mrb[0].mxu0
  %611 = vmatprep.mubr.f32.mxu0 0.0
  %612 = vmatmul.mubr.f32.gmra.mrb[0].mxu0 %v510
  %v613 = vpop.f32.mrb[0].mxu0
  %v614 = vadd.f32 %v485, %v613
  %v615 = vpop.f32.mrb[0].mxu0
  %616 = vdwg.mxu0
  %v617 = vmax.f32 %v579, 0.0
  %v618 = vmax.f32 %v584, 0.0
  %v619 = vmax.f32 %v589, 0.0
  %v620 = vmax.f32 %v594, 0.0
  %v621 = vmax.f32 %v599, 0.0
  %v622 = vmax.f32 %v604, 0.0
  %v623 = vmax.f32 %v609, 0.0
  %v624 = vmax.f32 %v614, 0.0
  %v633 = vrot.slane %v618, 7
  %vm634 = vcmask 1041409
  %v635 = vsel %vm634, %v633, %v617
  %v636 = vrot.slane %v619, 6
  %vm637 = vcmask 1042434
  %v638 = vsel %vm637, %v636, %v635
  %v639 = vrot.slane %v620, 5
  %vm640 = vcmask 1043459
  %v641 = vsel %vm640, %v639, %v638
  %v642 = vrot.slane %v621, 4
  %vm643 = vcmask 1044484
  %v644 = vsel %vm643, %v642, %v641
  %v645 = vrot.slane %v622, 3
  %vm646 = vcmask 1045509
  %v647 = vsel %vm646, %v645, %v644
  %v648 = vrot.slane %v623, 2
  %vm649 = vcmask 1046534
  %v650 = vsel %vm649, %v648, %v647
  %v651 = vrot.slane %v624, 1
  %vm652 = vcmask 1047559
  %v653 = vsel %vm652, %v651, %v650
  %v655 = vrot.slane %v617, 1
  %v656 = vsel %vm634, %v618, %v655
  %v657 = vrot.slane %v619, 7
  %v658 = vsel %vm637, %v657, %v656
  %v659 = vrot.slane %v620, 6
  %v660 = vsel %vm640, %v659, %v658
  %v661 = vrot.slane %v621, 5
  %v662 = vsel %vm643, %v661, %v660
  %v663 = vrot.slane %v622, 4
  %v664 = vsel %vm646, %v663, %v662
  %v665 = vrot.slane %v623, 3
  %v666 = vsel %vm649, %v665, %v664
  %v667 = vrot.slane %v624, 2
  %v668 = vsel %vm652, %v667, %v666
  %669 = vrot.lane.b32.xlu0 %v668, 8
  %v670 = vpop.permute.xlu0 %669
  %v672 = vrot.slane %v617, 2
  %v673 = vrot.slane %v618, 1
  %v674 = vsel %vm634, %v673, %v672
  %v675 = vsel %vm637, %v619, %v674
  %v676 = vrot.slane %v620, 7
  %v677 = vsel %vm640, %v676, %v675
  %v678 = vrot.slane %v621, 6
  %v679 = vsel %vm643, %v678, %v677
  %v680 = vrot.slane %v622, 5
  %v681 = vsel %vm646, %v680, %v679
  %v682 = vrot.slane %v623, 4
  %v683 = vsel %vm649, %v682, %v681
  %v684 = vrot.slane %v624, 3
  %v685 = vsel %vm652, %v684, %v683
  %686 = vrot.lane.b32.xlu0 %v685, 16
  %v687 = vpop.permute.xlu0 %686
  %v689 = vrot.slane %v617, 3
  %v690 = vrot.slane %v618, 2
  %v691 = vsel %vm634, %v690, %v689
  %v692 = vrot.slane %v619, 1
  %v693 = vsel %vm637, %v692, %v691
  %v694 = vsel %vm640, %v620, %v693
  %v695 = vrot.slane %v621, 7
  %v696 = vsel %vm643, %v695, %v694
  %v697 = vrot.slane %v622, 6
  %v698 = vsel %vm646, %v697, %v696
  %v699 = vrot.slane %v623, 5
  %v700 = vsel %vm649, %v699, %v698
  %v701 = vrot.slane %v624, 4
  %v702 = vsel %vm652, %v701, %v700
  %703 = vrot.lane.b32.xlu0 %v702, 24
  %v704 = vpop.permute.xlu0 %703
  %v706 = vrot.slane %v617, 4
  %v707 = vrot.slane %v618, 3
  %v708 = vsel %vm634, %v707, %v706
  %v709 = vrot.slane %v619, 2
  %v710 = vsel %vm637, %v709, %v708
  %v711 = vrot.slane %v620, 1
  %v712 = vsel %vm640, %v711, %v710
  %v713 = vsel %vm643, %v621, %v712
  %v714 = vrot.slane %v622, 7
  %v715 = vsel %vm646, %v714, %v713
  %v716 = vrot.slane %v623, 6
  %v717 = vsel %vm649, %v716, %v715
  %v718 = vrot.slane %v624, 5
  %v719 = vsel %vm652, %v718, %v717
  %720 = vrot.lane.b32.xlu0 %v719, 32
  %v721 = vpop.permute.xlu0 %720
  %v723 = vrot.slane %v617, 5
  %v724 = vrot.slane %v618, 4
  %v725 = vsel %vm634, %v724, %v723
  %v726 = vrot.slane %v619, 3
  %v727 = vsel %vm637, %v726, %v725
  %v728 = vrot.slane %v620, 2
  %v729 = vsel %vm640, %v728, %v727
  %v730 = vrot.slane %v621, 1
  %v731 = vsel %vm643, %v730, %v729
  %v732 = vsel %vm646, %v622, %v731
  %v733 = vrot.slane %v623, 7
  %v734 = vsel %vm649, %v733, %v732
  %v735 = vrot.slane %v624, 6
  %v736 = vsel %vm652, %v735, %v734
  %737 = vrot.lane.b32.xlu0 %v736, 40
  %v738 = vpop.permute.xlu0 %737
  %v740 = vrot.slane %v617, 6
  %v741 = vrot.slane %v618, 5
  %v742 = vsel %vm634, %v741, %v740
  %v743 = vrot.slane %v619, 4
  %v744 = vsel %vm637, %v743, %v742
  %v745 = vrot.slane %v620, 3
  %v746 = vsel %vm640, %v745, %v744
  %v747 = vrot.slane %v621, 2
  %v748 = vsel %vm643, %v747, %v746
  %v749 = vrot.slane %v622, 1
  %v750 = vsel %vm646, %v749, %v748
  %v751 = vsel %vm649, %v623, %v750
  %v752 = vrot.slane %v624, 7
  %v753 = vsel %vm652, %v752, %v751
  %754 = vrot.lane.b32.xlu0 %v753, 48
  %v755 = vpop.permute.xlu0 %754
  %v757 = vrot.slane %v617, 7
  %v758 = vrot.slane %v618, 6
  %v759 = vsel %vm634, %v758, %v757
  %v760 = vrot.slane %v619, 5
  %v761 = vsel %vm637, %v760, %v759
  %v762 = vrot.slane %v620, 4
  %v763 = vsel %vm640, %v762, %v761
  %v764 = vrot.slane %v621, 3
  %v765 = vsel %vm643, %v764, %v763
  %v766 = vrot.slane %v622, 2
  %v767 = vsel %vm646, %v766, %v765
  %v768 = vrot.slane %v623, 1
  %v769 = vsel %vm649, %v768, %v767
  %v770 = vsel %vm652, %v624, %v769
  %771 = vrot.lane.b32.xlu0 %v770, 56
  %v772 = vpop.permute.xlu0 %771
  %v774 = vsel %vm363, %v653, %v670
  %v775 = vsel %vm468, %v774, %v687
  %v776 = vsel %vm487, %v775, %v704
  %vm777 = vcmask 261120
  %v778 = vsel %vm777, %v776, %v721
  %vm779 = vcmask 326656
  %v780 = vsel %vm779, %v778, %v738
  %vm781 = vcmask 392192
  %v782 = vsel %vm781, %v780, %v755
  %vm783 = vcmask 457728
  %v784 = vsel %vm783, %v782, %v772
  %v785 = vld [vmem:[%s6] sm:$0xff]
  %v786 = vld [vmem:[%s6 + $0x8] sm:$0xff]
  %v787 = vld [vmem:[%s6 + $0x10] sm:$0xff]
  %v788 = vld [vmem:[%s6 + $0x18] sm:$0xff]
  %v789 = vld [vmem:[%s6 + $0x20] sm:$0xff]
  %v790 = vld [vmem:[%s6 + $0x28] sm:$0xff]
  %v791 = vld [vmem:[%s6 + $0x30] sm:$0xff]
  %v792 = vld [vmem:[%s6 + $0x38] sm:$0xff]
  %v793 = vld [vmem:[%s7] sm:$0x1]
  %v795 = vlaneseq
  %v796 = vshrl.u32 %v795, 7
  %v797 = vsub.s32 0, %v796
  %v798 = vrot.slane %v793, %v797
  %vm800 = vcmask 523264
  %v802 = vsel %vm800, %v784, 0
  %804 = vmatprep.subr.mxu0 0.0
  %805 = vmatpush1.msra.mxu0 %v785
  %806 = vmatprep.subr.mxu0 0.0
  %807 = vmatpush1.msra.mxu0 %v786
  %808 = vmatprep.subr.mxu0 0.0
  %809 = vmatpush1.msra.mxu0 %v787
  %810 = vmatprep.subr.mxu0 0.0
  %811 = vmatpush1.msra.mxu0 %v788
  %812 = vmatprep.subr.mxu0 0.0
  %813 = vmatpush1.msra.mxu0 %v789
  %814 = vmatprep.subr.mxu0 0.0
  %815 = vmatpush1.msra.mxu0 %v790
  %816 = vmatprep.subr.mxu0 0.0
  %817 = vmatpush1.msra.mxu0 %v791
  %818 = vmatprep.subr.mxu0 0.0
  %819 = vmatpush1.msra.mxu0 %v792
  %820 = vmatprep.subr.mxu0 0.0
  %821 = vmatpush1.msra.mxu0 0.0
  %822 = vmatprep.subr.mxu0 0.0
  %823 = vmatpush1.msra.mxu0 0.0
  %824 = vmatprep.subr.mxu0 0.0
  %825 = vmatpush1.msra.mxu0 0.0
  %826 = vmatprep.subr.mxu0 0.0
  %827 = vmatpush1.msra.mxu0 0.0
  %828 = vmatprep.subr.mxu0 0.0
  %829 = vmatpush1.msra.mxu0 0.0
  %830 = vmatprep.subr.mxu0 0.0
  %831 = vmatpush1.msra.mxu0 0.0
  %832 = vmatprep.subr.mxu0 0.0
  %833 = vmatpush1.msra.mxu0 0.0
  %834 = vmatprep.subr.mxu0 0.0
  %835 = vmatpush1.msra.mxu0 0.0
  %836 = vmatprep.subr.mxu0 0.0
  %837 = vmatpush1.msra.mxu0 0.0
  %838 = vmatprep.subr.mxu0 0.0
  %839 = vmatpush1.msra.mxu0 0.0
  %840 = vmatprep.subr.mxu0 0.0
  %841 = vmatpush1.msra.mxu0 0.0
  %842 = vmatprep.subr.mxu0 0.0
  %843 = vmatpush1.msra.mxu0 0.0
  %844 = vmatprep.subr.mxu0 0.0
  %845 = vmatpush1.msra.mxu0 0.0
  %846 = vmatprep.subr.mxu0 0.0
  %847 = vmatpush1.msra.mxu0 0.0
  %848 = vmatprep.subr.mxu0 0.0
  %849 = vmatpush1.msra.mxu0 0.0
  %850 = vmatprep.subr.mxu0 0.0
  %851 = vmatpush1.msra.mxu0 0.0
  %852 = vmatprep.subr.mxu0 0.0
  %853 = vmatpush1.msra.mxu0 0.0
  %854 = vmatprep.subr.mxu0 0.0
  %855 = vmatpush1.msra.mxu0 0.0
  %856 = vmatprep.subr.mxu0 0.0
  %857 = vmatpush1.msra.mxu0 0.0
  %858 = vmatprep.subr.mxu0 0.0
  %859 = vmatpush1.msra.mxu0 0.0
  %860 = vmatprep.subr.mxu0 0.0
  %861 = vmatpush1.msra.mxu0 0.0
  %862 = vmatprep.subr.mxu0 0.0
  %863 = vmatpush1.msra.mxu0 0.0
  %864 = vmatprep.subr.mxu0 0.0
  %865 = vmatpush1.msra.mxu0 0.0
  %866 = vmatprep.subr.mxu0 0.0
  %867 = vmatpush1.msra.mxu0 0.0
  %868 = vmatprep.mubr.f32.mxu0 0.0
  %869 = vmatmul.mubr.f32.gmra.mrb[0].mxu0 %v802
  %v870 = vpop.f32.mrb[0].mxu0
  %v871 = vadd.f32 %v798, %v870
  %v872 = vpop.f32.mrb[0].mxu0
  %873 = vdwg.mxu0
  %v874 = vld [vmem:[%s1] sm:$0x1]
  %v875 = vld [vmem:[%s1 + $0x4] sm:$0x1]
  %v876 = vld [vmem:[%s1 + $0x8] sm:$0x1]
  %v877 = vld [vmem:[%s1 + $0xc] sm:$0x1]
  %v878 = vld [vmem:[%s1 + $0x10] sm:$0x1]
  %v879 = vld [vmem:[%s1 + $0x14] sm:$0x1]
  %v880 = vld [vmem:[%s1 + $0x18] sm:$0x1]
  %v881 = vld [vmem:[%s1 + $0x1c] sm:$0x1]
  %v882 = vld [vmem:[%s1 + $0x1] sm:$0x1]
  %v883 = vld [vmem:[%s1 + $0x5] sm:$0x1]
  %v884 = vld [vmem:[%s1 + $0x9] sm:$0x1]
  %v885 = vld [vmem:[%s1 + $0xd] sm:$0x1]
  %v886 = vld [vmem:[%s1 + $0x11] sm:$0x1]
  %v887 = vld [vmem:[%s1 + $0x15] sm:$0x1]
  %v888 = vld [vmem:[%s1 + $0x19] sm:$0x1]
  %v889 = vld [vmem:[%s1 + $0x1d] sm:$0x1]
  %v890 = vld [vmem:[%s1 + $0x2] sm:$0x1]
  %v891 = vld [vmem:[%s1 + $0x6] sm:$0x1]
  %v892 = vld [vmem:[%s1 + $0xa] sm:$0x1]
  %v893 = vld [vmem:[%s1 + $0xe] sm:$0x1]
  %v894 = vld [vmem:[%s1 + $0x12] sm:$0x1]
  %v895 = vld [vmem:[%s1 + $0x16] sm:$0x1]
  %v896 = vld [vmem:[%s1 + $0x1a] sm:$0x1]
  %v897 = vld [vmem:[%s1 + $0x1e] sm:$0x1]
  %v898 = vld [vmem:[%s1 + $0x3] sm:$0x1]
  %v899 = vld [vmem:[%s1 + $0x7] sm:$0x1]
  %v900 = vld [vmem:[%s1 + $0xb] sm:$0x1]
  %v901 = vld [vmem:[%s1 + $0xf] sm:$0x1]
  %v902 = vld [vmem:[%s1 + $0x13] sm:$0x1]
  %v903 = vld [vmem:[%s1 + $0x17] sm:$0x1]
  %v904 = vld [vmem:[%s1 + $0x1b] sm:$0x1]
  %v905 = vld [vmem:[%s1 + $0x1f] sm:$0x1]
  %v914 = vrot.slane %v875, 7
  %v915 = vsel %vm634, %v914, %v874
  %v916 = vrot.slane %v876, 6
  %v917 = vsel %vm637, %v916, %v915
  %v918 = vrot.slane %v877, 5
  %v919 = vsel %vm640, %v918, %v917
  %v920 = vrot.slane %v878, 4
  %v921 = vsel %vm643, %v920, %v919
  %v922 = vrot.slane %v879, 3
  %v923 = vsel %vm646, %v922, %v921
  %v924 = vrot.slane %v880, 2
  %v925 = vsel %vm649, %v924, %v923
  %v926 = vrot.slane %v881, 1
  %v927 = vsel %vm652, %v926, %v925
  %v936 = vrot.slane %v883, 7
  %v937 = vsel %vm634, %v936, %v882
  %v938 = vrot.slane %v884, 6
  %v939 = vsel %vm637, %v938, %v937
  %v940 = vrot.slane %v885, 5
  %v941 = vsel %vm640, %v940, %v939
  %v942 = vrot.slane %v886, 4
  %v943 = vsel %vm643, %v942, %v941
  %v944 = vrot.slane %v887, 3
  %v945 = vsel %vm646, %v944, %v943
  %v946 = vrot.slane %v888, 2
  %v947 = vsel %vm649, %v946, %v945
  %v948 = vrot.slane %v889, 1
  %v949 = vsel %vm652, %v948, %v947
  %v958 = vrot.slane %v891, 7
  %v959 = vsel %vm634, %v958, %v890
  %v960 = vrot.slane %v892, 6
  %v961 = vsel %vm637, %v960, %v959
  %v962 = vrot.slane %v893, 5
  %v963 = vsel %vm640, %v962, %v961
  %v964 = vrot.slane %v894, 4
  %v965 = vsel %vm643, %v964, %v963
  %v966 = vrot.slane %v895, 3
  %v967 = vsel %vm646, %v966, %v965
  %v968 = vrot.slane %v896, 2
  %v969 = vsel %vm649, %v968, %v967
  %v970 = vrot.slane %v897, 1
  %v971 = vsel %vm652, %v970, %v969
  %v980 = vrot.slane %v899, 7
  %v981 = vsel %vm634, %v980, %v898
  %v982 = vrot.slane %v900, 6
  %v983 = vsel %vm637, %v982, %v981
  %v984 = vrot.slane %v901, 5
  %v985 = vsel %vm640, %v984, %v983
  %v986 = vrot.slane %v902, 4
  %v987 = vsel %vm643, %v986, %v985
  %v988 = vrot.slane %v903, 3
  %v989 = vsel %vm646, %v988, %v987
  %v990 = vrot.slane %v904, 2
  %v991 = vsel %vm649, %v990, %v989
  %v992 = vrot.slane %v905, 1
  %v993 = vsel %vm652, %v992, %v991
  %v994 = vld [vmem:[%s9] sm:$0x3]
  %v995 = vld [vmem:[%s10] sm:$0x1]
  %v997 = vlaneseq
  %v998 = vshrl.u32 %v997, 7
  %v999 = vsub.s32 0, %v998
  %v1000 = vrot.slane %v995, %v999
  %vm1002 = vcmask 15360
  %v1003 = vsel %vm1002, %v927, 0
  %v1005 = vsel %vm1002, %v949, 0
  %v1007 = vsel %vm1002, %v971, 0
  %v1009 = vsel %vm1002, %v993, 0
  %vm1011 = vcmask 1041408
  %v1013 = vsel %vm1011, %v994, 0
  %1015 = vmatprep.subr.mxu0 0.0
  %1016 = vmatpush1.msra.mxu0 %v1013
  %1017 = vmatprep.subr.mxu0 0.0
  %1018 = vmatpush1.msra.mxu0 0.0
  %1019 = vmatprep.subr.mxu0 0.0
  %1020 = vmatpush1.msra.mxu0 0.0
  %1021 = vmatprep.subr.mxu0 0.0
  %1022 = vmatpush1.msra.mxu0 0.0
  %1023 = vmatprep.subr.mxu0 0.0
  %1024 = vmatpush1.msra.mxu0 0.0
  %1025 = vmatprep.subr.mxu0 0.0
  %1026 = vmatpush1.msra.mxu0 0.0
  %1027 = vmatprep.subr.mxu0 0.0
  %1028 = vmatpush1.msra.mxu0 0.0
  %1029 = vmatprep.subr.mxu0 0.0
  %1030 = vmatpush1.msra.mxu0 0.0
  %1031 = vmatprep.subr.mxu0 0.0
  %1032 = vmatpush1.msra.mxu0 0.0
  %1033 = vmatprep.subr.mxu0 0.0
  %1034 = vmatpush1.msra.mxu0 0.0
  %1035 = vmatprep.subr.mxu0 0.0
  %1036 = vmatpush1.msra.mxu0 0.0
  %1037 = vmatprep.subr.mxu0 0.0
  %1038 = vmatpush1.msra.mxu0 0.0
  %1039 = vmatprep.subr.mxu0 0.0
  %1040 = vmatpush1.msra.mxu0 0.0
  %1041 = vmatprep.subr.mxu0 0.0
  %1042 = vmatpush1.msra.mxu0 0.0
  %1043 = vmatprep.subr.mxu0 0.0
  %1044 = vmatpush1.msra.mxu0 0.0
  %1045 = vmatprep.subr.mxu0 0.0
  %1046 = vmatpush1.msra.mxu0 0.0
  %1047 = vmatprep.subr.mxu0 0.0
  %1048 = vmatpush1.msra.mxu0 0.0
  %1049 = vmatprep.subr.mxu0 0.0
  %1050 = vmatpush1.msra.mxu0 0.0
  %1051 = vmatprep.subr.mxu0 0.0
  %1052 = vmatpush1.msra.mxu0 0.0
  %1053 = vmatprep.subr.mxu0 0.0
  %1054 = vmatpush1.msra.mxu0 0.0
  %1055 = vmatprep.subr.mxu0 0.0
  %1056 = vmatpush1.msra.mxu0 0.0
  %1057 = vmatprep.subr.mxu0 0.0
  %1058 = vmatpush1.msra.mxu0 0.0
  %1059 = vmatprep.subr.mxu0 0.0
  %1060 = vmatpush1.msra.mxu0 0.0
  %1061 = vmatprep.subr.mxu0 0.0
  %1062 = vmatpush1.msra.mxu0 0.0
  %1063 = vmatprep.subr.mxu0 0.0
  %1064 = vmatpush1.msra.mxu0 0.0
  %1065 = vmatprep.subr.mxu0 0.0
  %1066 = vmatpush1.msra.mxu0 0.0
  %1067 = vmatprep.subr.mxu0 0.0
  %1068 = vmatpush1.msra.mxu0 0.0
  %1069 = vmatprep.subr.mxu0 0.0
  %1070 = vmatpush1.msra.mxu0 0.0
  %1071 = vmatprep.subr.mxu0 0.0
  %1072 = vmatpush1.msra.mxu0 0.0
  %1073 = vmatprep.subr.mxu0 0.0
  %1074 = vmatpush1.msra.mxu0 0.0
  %1075 = vmatprep.subr.mxu0 0.0
  %1076 = vmatpush1.msra.mxu0 0.0
  %1077 = vmatprep.subr.mxu0 0.0
  %1078 = vmatpush1.msra.mxu0 0.0
  %1079 = vmatprep.mubr.f32.mxu0 0.0
  %1080 = vmatmul.mubr.f32.gmra.mrb[0].mxu0 %v1003
  %v1081 = vpop.f32.mrb[0].mxu0
  %v1082 = vadd.f32 %v1000, %v1081
  %v1083 = vpop.f32.mrb[0].mxu0
  %1084 = vmatprep.mubr.f32.mxu0 0.0
  %1085 = vmatmul.mubr.f32.gmra.mrb[0].mxu0 %v1005
  %v1086 = vpop.f32.mrb[0].mxu0
  %v1087 = vadd.f32 %v1000, %v1086
  %v1088 = vpop.f32.mrb[0].mxu0
  %1089 = vmatprep.mubr.f32.mxu0 0.0
  %1090 = vmatmul.mubr.f32.gmra.mrb[0].mxu0 %v1007
  %v1091 = vpop.f32.mrb[0].mxu0
  %v1092 = vadd.f32 %v1000, %v1091
  %v1093 = vpop.f32.mrb[0].mxu0
  %1094 = vmatprep.mubr.f32.mxu0 0.0
  %1095 = vmatmul.mubr.f32.gmra.mrb[0].mxu0 %v1009
  %v1096 = vpop.f32.mrb[0].mxu0
  %v1097 = vadd.f32 %v1000, %v1096
  %v1098 = vpop.f32.mrb[0].mxu0
  %1099 = vdwg.mxu0
  %v1100 = vld [vmem:[%s8] sm:$0xff]
  %v1101 = vld [vmem:[%s8 + $0x8] sm:$0xff]
  %v1102 = vld [vmem:[%s11] sm:$0xff]
  %v1103 = vld [vmem:[%s11 + $0x8] sm:$0xff]
  %v1104 = vld [vmem:[%s12] sm:$0x1]
  %v1106 = vsel %vm468, %v871, 0
  %1108 = vmatprep.subr.mxu0 0.0
  %1109 = vmatpush1.msra.mxu0 %v1100
  %1110 = vmatprep.subr.mxu0 0.0
  %1111 = vmatpush1.msra.mxu0 %v1101
  %1112 = vmatprep.subr.mxu0 0.0
  %1113 = vmatpush1.msra.mxu0 0.0
  %1114 = vmatprep.subr.mxu0 0.0
  %1115 = vmatpush1.msra.mxu0 0.0
  %1116 = vmatprep.subr.mxu0 0.0
  %1117 = vmatpush1.msra.mxu0 0.0
  %1118 = vmatprep.subr.mxu0 0.0
  %1119 = vmatpush1.msra.mxu0 0.0
  %1120 = vmatprep.subr.mxu0 0.0
  %1121 = vmatpush1.msra.mxu0 0.0
  %1122 = vmatprep.subr.mxu0 0.0
  %1123 = vmatpush1.msra.mxu0 0.0
  %1124 = vmatprep.subr.mxu0 0.0
  %1125 = vmatpush1.msra.mxu0 0.0
  %1126 = vmatprep.subr.mxu0 0.0
  %1127 = vmatpush1.msra.mxu0 0.0
  %1128 = vmatprep.subr.mxu0 0.0
  %1129 = vmatpush1.msra.mxu0 0.0
  %1130 = vmatprep.subr.mxu0 0.0
  %1131 = vmatpush1.msra.mxu0 0.0
  %1132 = vmatprep.subr.mxu0 0.0
  %1133 = vmatpush1.msra.mxu0 0.0
  %1134 = vmatprep.subr.mxu0 0.0
  %1135 = vmatpush1.msra.mxu0 0.0
  %1136 = vmatprep.subr.mxu0 0.0
  %1137 = vmatpush1.msra.mxu0 0.0
  %1138 = vmatprep.subr.mxu0 0.0
  %1139 = vmatpush1.msra.mxu0 0.0
  %1140 = vmatprep.subr.mxu0 0.0
  %1141 = vmatpush1.msra.mxu0 0.0
  %1142 = vmatprep.subr.mxu0 0.0
  %1143 = vmatpush1.msra.mxu0 0.0
  %1144 = vmatprep.subr.mxu0 0.0
  %1145 = vmatpush1.msra.mxu0 0.0
  %1146 = vmatprep.subr.mxu0 0.0
  %1147 = vmatpush1.msra.mxu0 0.0
  %1148 = vmatprep.subr.mxu0 0.0
  %1149 = vmatpush1.msra.mxu0 0.0
  %1150 = vmatprep.subr.mxu0 0.0
  %1151 = vmatpush1.msra.mxu0 0.0
  %1152 = vmatprep.subr.mxu0 0.0
  %1153 = vmatpush1.msra.mxu0 0.0
  %1154 = vmatprep.subr.mxu0 0.0
  %1155 = vmatpush1.msra.mxu0 0.0
  %1156 = vmatprep.subr.mxu0 0.0
  %1157 = vmatpush1.msra.mxu0 0.0
  %1158 = vmatprep.subr.mxu0 0.0
  %1159 = vmatpush1.msra.mxu0 0.0
  %1160 = vmatprep.subr.mxu0 0.0
  %1161 = vmatpush1.msra.mxu0 0.0
  %1162 = vmatprep.subr.mxu0 0.0
  %1163 = vmatpush1.msra.mxu0 0.0
  %1164 = vmatprep.subr.mxu0 0.0
  %1165 = vmatpush1.msra.mxu0 0.0
  %1166 = vmatprep.subr.mxu0 0.0
  %1167 = vmatpush1.msra.mxu0 0.0
  %1168 = vmatprep.subr.mxu0 0.0
  %1169 = vmatpush1.msra.mxu0 0.0
  %1170 = vmatprep.subr.mxu0 0.0
  %1171 = vmatpush1.msra.mxu0 0.0
  %1172 = vmatprep.mubr.f32.mxu0 0.0
  %1173 = vmatmul.mubr.f32.gmra.mrb[0].mxu0 %v1106
  %v1174 = vpop.f32.mrb[0].mxu0
  %v1175 = vadd.f32 %v1082, %v1174
  %v1176 = vpop.f32.mrb[0].mxu0
  %1177 = vdwg.mxu0
  %v1178 = vmax.f32 %v1175, 0.0
  %v1180 = vsel %vm468, %v1178, 0
  %1182 = vmatprep.subr.mxu0 0.0
  %1183 = vmatpush1.msra.mxu0 %v1102
  %1184 = vmatprep.subr.mxu0 0.0
  %1185 = vmatpush1.msra.mxu0 %v1103
  %1186 = vmatprep.subr.mxu0 0.0
  %1187 = vmatpush1.msra.mxu0 0.0
  %1188 = vmatprep.subr.mxu0 0.0
  %1189 = vmatpush1.msra.mxu0 0.0
  %1190 = vmatprep.subr.mxu0 0.0
  %1191 = vmatpush1.msra.mxu0 0.0
  %1192 = vmatprep.subr.mxu0 0.0
  %1193 = vmatpush1.msra.mxu0 0.0
  %1194 = vmatprep.subr.mxu0 0.0
  %1195 = vmatpush1.msra.mxu0 0.0
  %1196 = vmatprep.subr.mxu0 0.0
  %1197 = vmatpush1.msra.mxu0 0.0
  %1198 = vmatprep.subr.mxu0 0.0
  %1199 = vmatpush1.msra.mxu0 0.0
  %1200 = vmatprep.subr.mxu0 0.0
  %1201 = vmatpush1.msra.mxu0 0.0
  %1202 = vmatprep.subr.mxu0 0.0
  %1203 = vmatpush1.msra.mxu0 0.0
  %1204 = vmatprep.subr.mxu0 0.0
  %1205 = vmatpush1.msra.mxu0 0.0
  %1206 = vmatprep.subr.mxu0 0.0
  %1207 = vmatpush1.msra.mxu0 0.0
  %1208 = vmatprep.subr.mxu0 0.0
  %1209 = vmatpush1.msra.mxu0 0.0
  %1210 = vmatprep.subr.mxu0 0.0
  %1211 = vmatpush1.msra.mxu0 0.0
  %1212 = vmatprep.subr.mxu0 0.0
  %1213 = vmatpush1.msra.mxu0 0.0
  %1214 = vmatprep.subr.mxu0 0.0
  %1215 = vmatpush1.msra.mxu0 0.0
  %1216 = vmatprep.subr.mxu0 0.0
  %1217 = vmatpush1.msra.mxu0 0.0
  %1218 = vmatprep.subr.mxu0 0.0
  %1219 = vmatpush1.msra.mxu0 0.0
  %1220 = vmatprep.subr.mxu0 0.0
  %1221 = vmatpush1.msra.mxu0 0.0
  %1222 = vmatprep.subr.mxu0 0.0
  %1223 = vmatpush1.msra.mxu0 0.0
  %1224 = vmatprep.subr.mxu0 0.0
  %1225 = vmatpush1.msra.mxu0 0.0
  %1226 = vmatprep.subr.mxu0 0.0
  %1227 = vmatpush1.msra.mxu0 0.0
  %1228 = vmatprep.subr.mxu0 0.0
  %1229 = vmatpush1.msra.mxu0 0.0
  %1230 = vmatprep.subr.mxu0 0.0
  %1231 = vmatpush1.msra.mxu0 0.0
  %1232 = vmatprep.subr.mxu0 0.0
  %1233 = vmatpush1.msra.mxu0 0.0
  %1234 = vmatprep.subr.mxu0 0.0
  %1235 = vmatpush1.msra.mxu0 0.0
  %1236 = vmatprep.subr.mxu0 0.0
  %1237 = vmatpush1.msra.mxu0 0.0
  %1238 = vmatprep.subr.mxu0 0.0
  %1239 = vmatpush1.msra.mxu0 0.0
  %1240 = vmatprep.subr.mxu0 0.0
  %1241 = vmatpush1.msra.mxu0 0.0
  %1242 = vmatprep.subr.mxu0 0.0
  %1243 = vmatpush1.msra.mxu0 0.0
  %1244 = vmatprep.subr.mxu0 0.0
  %1245 = vmatpush1.msra.mxu0 0.0
  %1246 = vmatprep.mubr.f32.mxu0 0.0
  %1247 = vmatmul.mubr.f32.gmra.mrb[0].mxu0 %v1180
  %v1248 = vpop.f32.mrb[0].mxu0
  %v1249 = vadd.f32 0.0, %v1248
  %v1250 = vpop.f32.mrb[0].mxu0
  %1251 = vdwg.mxu0
  %v1252 = vadd.f32 %v871, %v1249
  %v1254 = vlaneseq
  %v1255 = vshrl.u32 %v1254, 7
  %v1256 = vsub.s32 0, %v1255
  %v1257 = vrot.slane %v1104, %v1256
  %v1259 = vadd.f32 %v1252, %v1257
  %v1261 = vsel %vm468, %v1259, 0
  %1263 = vmatprep.subr.mxu0 0.0
  %1264 = vmatpush1.msra.mxu0 %v1100
  %1265 = vmatprep.subr.mxu0 0.0
  %1266 = vmatpush1.msra.mxu0 %v1101
  %1267 = vmatprep.subr.mxu0 0.0
  %1268 = vmatpush1.msra.mxu0 0.0
  %1269 = vmatprep.subr.mxu0 0.0
  %1270 = vmatpush1.msra.mxu0 0.0
  %1271 = vmatprep.subr.mxu0 0.0
  %1272 = vmatpush1.msra.mxu0 0.0
  %1273 = vmatprep.subr.mxu0 0.0
  %1274 = vmatpush1.msra.mxu0 0.0
  %1275 = vmatprep.subr.mxu0 0.0
  %1276 = vmatpush1.msra.mxu0 0.0
  %1277 = vmatprep.subr.mxu0 0.0
  %1278 = vmatpush1.msra.mxu0 0.0
  %1279 = vmatprep.subr.mxu0 0.0
  %1280 = vmatpush1.msra.mxu0 0.0
  %1281 = vmatprep.subr.mxu0 0.0
  %1282 = vmatpush1.msra.mxu0 0.0
  %1283 = vmatprep.subr.mxu0 0.0
  %1284 = vmatpush1.msra.mxu0 0.0
  %1285 = vmatprep.subr.mxu0 0.0
  %1286 = vmatpush1.msra.mxu0 0.0
  %1287 = vmatprep.subr.mxu0 0.0
  %1288 = vmatpush1.msra.mxu0 0.0
  %1289 = vmatprep.subr.mxu0 0.0
  %1290 = vmatpush1.msra.mxu0 0.0
  %1291 = vmatprep.subr.mxu0 0.0
  %1292 = vmatpush1.msra.mxu0 0.0
  %1293 = vmatprep.subr.mxu0 0.0
  %1294 = vmatpush1.msra.mxu0 0.0
  %1295 = vmatprep.subr.mxu0 0.0
  %1296 = vmatpush1.msra.mxu0 0.0
  %1297 = vmatprep.subr.mxu0 0.0
  %1298 = vmatpush1.msra.mxu0 0.0
  %1299 = vmatprep.subr.mxu0 0.0
  %1300 = vmatpush1.msra.mxu0 0.0
  %1301 = vmatprep.subr.mxu0 0.0
  %1302 = vmatpush1.msra.mxu0 0.0
  %1303 = vmatprep.subr.mxu0 0.0
  %1304 = vmatpush1.msra.mxu0 0.0
  %1305 = vmatprep.subr.mxu0 0.0
  %1306 = vmatpush1.msra.mxu0 0.0
  %1307 = vmatprep.subr.mxu0 0.0
  %1308 = vmatpush1.msra.mxu0 0.0
  %1309 = vmatprep.subr.mxu0 0.0
  %1310 = vmatpush1.msra.mxu0 0.0
  %1311 = vmatprep.subr.mxu0 0.0
  %1312 = vmatpush1.msra.mxu0 0.0
  %1313 = vmatprep.subr.mxu0 0.0
  %1314 = vmatpush1.msra.mxu0 0.0
  %1315 = vmatprep.subr.mxu0 0.0
  %1316 = vmatpush1.msra.mxu0 0.0
  %1317 = vmatprep.subr.mxu0 0.0
  %1318 = vmatpush1.msra.mxu0 0.0
  %1319 = vmatprep.subr.mxu0 0.0
  %1320 = vmatpush1.msra.mxu0 0.0
  %1321 = vmatprep.subr.mxu0 0.0
  %1322 = vmatpush1.msra.mxu0 0.0
  %1323 = vmatprep.subr.mxu0 0.0
  %1324 = vmatpush1.msra.mxu0 0.0
  %1325 = vmatprep.subr.mxu0 0.0
  %1326 = vmatpush1.msra.mxu0 0.0
  %1327 = vmatprep.mubr.f32.mxu0 0.0
  %1328 = vmatmul.mubr.f32.gmra.mrb[0].mxu0 %v1261
  %v1329 = vpop.f32.mrb[0].mxu0
  %v1330 = vadd.f32 %v1087, %v1329
  %v1331 = vpop.f32.mrb[0].mxu0
  %1332 = vdwg.mxu0
  %v1333 = vmax.f32 %v1330, 0.0
  %v1335 = vsel %vm468, %v1333, 0
  %1337 = vmatprep.subr.mxu0 0.0
  %1338 = vmatpush1.msra.mxu0 %v1102
  %1339 = vmatprep.subr.mxu0 0.0
  %1340 = vmatpush1.msra.mxu0 %v1103
  %1341 = vmatprep.subr.mxu0 0.0
  %1342 = vmatpush1.msra.mxu0 0.0
  %1343 = vmatprep.subr.mxu0 0.0
  %1344 = vmatpush1.msra.mxu0 0.0
  %1345 = vmatprep.subr.mxu0 0.0
  %1346 = vmatpush1.msra.mxu0 0.0
  %1347 = vmatprep.subr.mxu0 0.0
  %1348 = vmatpush1.msra.mxu0 0.0
  %1349 = vmatprep.subr.mxu0 0.0
  %1350 = vmatpush1.msra.mxu0 0.0
  %1351 = vmatprep.subr.mxu0 0.0
  %1352 = vmatpush1.msra.mxu0 0.0
  %1353 = vmatprep.subr.mxu0 0.0
  %1354 = vmatpush1.msra.mxu0 0.0
  %1355 = vmatprep.subr.mxu0 0.0
  %1356 = vmatpush1.msra.mxu0 0.0
  %1357 = vmatprep.subr.mxu0 0.0
  %1358 = vmatpush1.msra.mxu0 0.0
  %1359 = vmatprep.subr.mxu0 0.0
  %1360 = vmatpush1.msra.mxu0 0.0
  %1361 = vmatprep.subr.mxu0 0.0
  %1362 = vmatpush1.msra.mxu0 0.0
  %1363 = vmatprep.subr.mxu0 0.0
  %1364 = vmatpush1.msra.mxu0 0.0
  %1365 = vmatprep.subr.mxu0 0.0
  %1366 = vmatpush1.msra.mxu0 0.0
  %1367 = vmatprep.subr.mxu0 0.0
  %1368 = vmatpush1.msra.mxu0 0.0
  %1369 = vmatprep.subr.mxu0 0.0
  %1370 = vmatpush1.msra.mxu0 0.0
  %1371 = vmatprep.subr.mxu0 0.0
  %1372 = vmatpush1.msra.mxu0 0.0
  %1373 = vmatprep.subr.mxu0 0.0
  %1374 = vmatpush1.msra.mxu0 0.0
  %1375 = vmatprep.subr.mxu0 0.0
  %1376 = vmatpush1.msra.mxu0 0.0
  %1377 = vmatprep.subr.mxu0 0.0
  %1378 = vmatpush1.msra.mxu0 0.0
  %1379 = vmatprep.subr.mxu0 0.0
  %1380 = vmatpush1.msra.mxu0 0.0
  %1381 = vmatprep.subr.mxu0 0.0
  %1382 = vmatpush1.msra.mxu0 0.0
  %1383 = vmatprep.subr.mxu0 0.0
  %1384 = vmatpush1.msra.mxu0 0.0
  %1385 = vmatprep.subr.mxu0 0.0
  %1386 = vmatpush1.msra.mxu0 0.0
  %1387 = vmatprep.subr.mxu0 0.0
  %1388 = vmatpush1.msra.mxu0 0.0
  %1389 = vmatprep.subr.mxu0 0.0
  %1390 = vmatpush1.msra.mxu0 0.0
  %1391 = vmatprep.subr.mxu0 0.0
  %1392 = vmatpush1.msra.mxu0 0.0
  %1393 = vmatprep.subr.mxu0 0.0
  %1394 = vmatpush1.msra.mxu0 0.0
  %1395 = vmatprep.subr.mxu0 0.0
  %1396 = vmatpush1.msra.mxu0 0.0
  %1397 = vmatprep.subr.mxu0 0.0
  %1398 = vmatpush1.msra.mxu0 0.0
  %1399 = vmatprep.subr.mxu0 0.0
  %1400 = vmatpush1.msra.mxu0 0.0
  %1401 = vmatprep.mubr.f32.mxu0 0.0
  %1402 = vmatmul.mubr.f32.gmra.mrb[0].mxu0 %v1335
  %v1403 = vpop.f32.mrb[0].mxu0
  %v1404 = vadd.f32 0.0, %v1403
  %v1405 = vpop.f32.mrb[0].mxu0
  %1406 = vdwg.mxu0
  %v1407 = vadd.f32 %v1259, %v1404
  %v1408 = vadd.f32 %v1407, %v1257
  %v1410 = vsel %vm468, %v1408, 0
  %1412 = vmatprep.subr.mxu0 0.0
  %1413 = vmatpush1.msra.mxu0 %v1100
  %1414 = vmatprep.subr.mxu0 0.0
  %1415 = vmatpush1.msra.mxu0 %v1101
  %1416 = vmatprep.subr.mxu0 0.0
  %1417 = vmatpush1.msra.mxu0 0.0
  %1418 = vmatprep.subr.mxu0 0.0
  %1419 = vmatpush1.msra.mxu0 0.0
  %1420 = vmatprep.subr.mxu0 0.0
  %1421 = vmatpush1.msra.mxu0 0.0
  %1422 = vmatprep.subr.mxu0 0.0
  %1423 = vmatpush1.msra.mxu0 0.0
  %1424 = vmatprep.subr.mxu0 0.0
  %1425 = vmatpush1.msra.mxu0 0.0
  %1426 = vmatprep.subr.mxu0 0.0
  %1427 = vmatpush1.msra.mxu0 0.0
  %1428 = vmatprep.subr.mxu0 0.0
  %1429 = vmatpush1.msra.mxu0 0.0
  %1430 = vmatprep.subr.mxu0 0.0
  %1431 = vmatpush1.msra.mxu0 0.0
  %1432 = vmatprep.subr.mxu0 0.0
  %1433 = vmatpush1.msra.mxu0 0.0
  %1434 = vmatprep.subr.mxu0 0.0
  %1435 = vmatpush1.msra.mxu0 0.0
  %1436 = vmatprep.subr.mxu0 0.0
  %1437 = vmatpush1.msra.mxu0 0.0
  %1438 = vmatprep.subr.mxu0 0.0
  %1439 = vmatpush1.msra.mxu0 0.0
  %1440 = vmatprep.subr.mxu0 0.0
  %1441 = vmatpush1.msra.mxu0 0.0
  %1442 = vmatprep.subr.mxu0 0.0
  %1443 = vmatpush1.msra.mxu0 0.0
  %1444 = vmatprep.subr.mxu0 0.0
  %1445 = vmatpush1.msra.mxu0 0.0
  %1446 = vmatprep.subr.mxu0 0.0
  %1447 = vmatpush1.msra.mxu0 0.0
  %1448 = vmatprep.subr.mxu0 0.0
  %1449 = vmatpush1.msra.mxu0 0.0
  %1450 = vmatprep.subr.mxu0 0.0
  %1451 = vmatpush1.msra.mxu0 0.0
  %1452 = vmatprep.subr.mxu0 0.0
  %1453 = vmatpush1.msra.mxu0 0.0
  %1454 = vmatprep.subr.mxu0 0.0
  %1455 = vmatpush1.msra.mxu0 0.0
  %1456 = vmatprep.subr.mxu0 0.0
  %1457 = vmatpush1.msra.mxu0 0.0
  %1458 = vmatprep.subr.mxu0 0.0
  %1459 = vmatpush1.msra.mxu0 0.0
  %1460 = vmatprep.subr.mxu0 0.0
  %1461 = vmatpush1.msra.mxu0 0.0
  %1462 = vmatprep.subr.mxu0 0.0
  %1463 = vmatpush1.msra.mxu0 0.0
  %1464 = vmatprep.subr.mxu0 0.0
  %1465 = vmatpush1.msra.mxu0 0.0
  %1466 = vmatprep.subr.mxu0 0.0
  %1467 = vmatpush1.msra.mxu0 0.0
  %1468 = vmatprep.subr.mxu0 0.0
  %1469 = vmatpush1.msra.mxu0 0.0
  %1470 = vmatprep.subr.mxu0 0.0
  %1471 = vmatpush1.msra.mxu0 0.0
  %1472 = vmatprep.subr.mxu0 0.0
  %1473 = vmatpush1.msra.mxu0 0.0
  %1474 = vmatprep.subr.mxu0 0.0
  %1475 = vmatpush1.msra.mxu0 0.0
  %1476 = vmatprep.mubr.f32.mxu0 0.0
  %1477 = vmatmul.mubr.f32.gmra.mrb[0].mxu0 %v1410
  %v1478 = vpop.f32.mrb[0].mxu0
  %v1479 = vadd.f32 %v1092, %v1478
  %v1480 = vpop.f32.mrb[0].mxu0
  %1481 = vdwg.mxu0
  %v1482 = vmax.f32 %v1479, 0.0
  %v1484 = vsel %vm468, %v1482, 0
  %1486 = vmatprep.subr.mxu0 0.0
  %1487 = vmatpush1.msra.mxu0 %v1102
  %1488 = vmatprep.subr.mxu0 0.0
  %1489 = vmatpush1.msra.mxu0 %v1103
  %1490 = vmatprep.subr.mxu0 0.0
  %1491 = vmatpush1.msra.mxu0 0.0
  %1492 = vmatprep.subr.mxu0 0.0
  %1493 = vmatpush1.msra.mxu0 0.0
  %1494 = vmatprep.subr.mxu0 0.0
  %1495 = vmatpush1.msra.mxu0 0.0
  %1496 = vmatprep.subr.mxu0 0.0
  %1497 = vmatpush1.msra.mxu0 0.0
  %1498 = vmatprep.subr.mxu0 0.0
  %1499 = vmatpush1.msra.mxu0 0.0
  %1500 = vmatprep.subr.mxu0 0.0
  %1501 = vmatpush1.msra.mxu0 0.0
  %1502 = vmatprep.subr.mxu0 0.0
  %1503 = vmatpush1.msra.mxu0 0.0
  %1504 = vmatprep.subr.mxu0 0.0
  %1505 = vmatpush1.msra.mxu0 0.0
  %1506 = vmatprep.subr.mxu0 0.0
  %1507 = vmatpush1.msra.mxu0 0.0
  %1508 = vmatprep.subr.mxu0 0.0
  %1509 = vmatpush1.msra.mxu0 0.0
  %1510 = vmatprep.subr.mxu0 0.0
  %1511 = vmatpush1.msra.mxu0 0.0
  %1512 = vmatprep.subr.mxu0 0.0
  %1513 = vmatpush1.msra.mxu0 0.0
  %1514 = vmatprep.subr.mxu0 0.0
  %1515 = vmatpush1.msra.mxu0 0.0
  %1516 = vmatprep.subr.mxu0 0.0
  %1517 = vmatpush1.msra.mxu0 0.0
  %1518 = vmatprep.subr.mxu0 0.0
  %1519 = vmatpush1.msra.mxu0 0.0
  %1520 = vmatprep.subr.mxu0 0.0
  %1521 = vmatpush1.msra.mxu0 0.0
  %1522 = vmatprep.subr.mxu0 0.0
  %1523 = vmatpush1.msra.mxu0 0.0
  %1524 = vmatprep.subr.mxu0 0.0
  %1525 = vmatpush1.msra.mxu0 0.0
  %1526 = vmatprep.subr.mxu0 0.0
  %1527 = vmatpush1.msra.mxu0 0.0
  %1528 = vmatprep.subr.mxu0 0.0
  %1529 = vmatpush1.msra.mxu0 0.0
  %1530 = vmatprep.subr.mxu0 0.0
  %1531 = vmatpush1.msra.mxu0 0.0
  %1532 = vmatprep.subr.mxu0 0.0
  %1533 = vmatpush1.msra.mxu0 0.0
  %1534 = vmatprep.subr.mxu0 0.0
  %1535 = vmatpush1.msra.mxu0 0.0
  %1536 = vmatprep.subr.mxu0 0.0
  %1537 = vmatpush1.msra.mxu0 0.0
  %1538 = vmatprep.subr.mxu0 0.0
  %1539 = vmatpush1.msra.mxu0 0.0
  %1540 = vmatprep.subr.mxu0 0.0
  %1541 = vmatpush1.msra.mxu0 0.0
  %1542 = vmatprep.subr.mxu0 0.0
  %1543 = vmatpush1.msra.mxu0 0.0
  %1544 = vmatprep.subr.mxu0 0.0
  %1545 = vmatpush1.msra.mxu0 0.0
  %1546 = vmatprep.subr.mxu0 0.0
  %1547 = vmatpush1.msra.mxu0 0.0
  %1548 = vmatprep.subr.mxu0 0.0
  %1549 = vmatpush1.msra.mxu0 0.0
  %1550 = vmatprep.mubr.f32.mxu0 0.0
  %1551 = vmatmul.mubr.f32.gmra.mrb[0].mxu0 %v1484
  %v1552 = vpop.f32.mrb[0].mxu0
  %v1553 = vadd.f32 0.0, %v1552
  %v1554 = vpop.f32.mrb[0].mxu0
  %1555 = vdwg.mxu0
  %v1556 = vadd.f32 %v1408, %v1553
  %v1557 = vadd.f32 %v1556, %v1257
  %v1559 = vsel %vm468, %v1557, 0
  %1561 = vmatprep.subr.mxu0 0.0
  %1562 = vmatpush1.msra.mxu0 %v1100
  %1563 = vmatprep.subr.mxu0 0.0
  %1564 = vmatpush1.msra.mxu0 %v1101
  %1565 = vmatprep.subr.mxu0 0.0
  %1566 = vmatpush1.msra.mxu0 0.0
  %1567 = vmatprep.subr.mxu0 0.0
  %1568 = vmatpush1.msra.mxu0 0.0
  %1569 = vmatprep.subr.mxu0 0.0
  %1570 = vmatpush1.msra.mxu0 0.0
  %1571 = vmatprep.subr.mxu0 0.0
  %1572 = vmatpush1.msra.mxu0 0.0
  %1573 = vmatprep.subr.mxu0 0.0
  %1574 = vmatpush1.msra.mxu0 0.0
  %1575 = vmatprep.subr.mxu0 0.0
  %1576 = vmatpush1.msra.mxu0 0.0
  %1577 = vmatprep.subr.mxu0 0.0
  %1578 = vmatpush1.msra.mxu0 0.0
  %1579 = vmatprep.subr.mxu0 0.0
  %1580 = vmatpush1.msra.mxu0 0.0
  %1581 = vmatprep.subr.mxu0 0.0
  %1582 = vmatpush1.msra.mxu0 0.0
  %1583 = vmatprep.subr.mxu0 0.0
  %1584 = vmatpush1.msra.mxu0 0.0
  %1585 = vmatprep.subr.mxu0 0.0
  %1586 = vmatpush1.msra.mxu0 0.0
  %1587 = vmatprep.subr.mxu0 0.0
  %1588 = vmatpush1.msra.mxu0 0.0
  %1589 = vmatprep.subr.mxu0 0.0
  %1590 = vmatpush1.msra.mxu0 0.0
  %1591 = vmatprep.subr.mxu0 0.0
  %1592 = vmatpush1.msra.mxu0 0.0
  %1593 = vmatprep.subr.mxu0 0.0
  %1594 = vmatpush1.msra.mxu0 0.0
  %1595 = vmatprep.subr.mxu0 0.0
  %1596 = vmatpush1.msra.mxu0 0.0
  %1597 = vmatprep.subr.mxu0 0.0
  %1598 = vmatpush1.msra.mxu0 0.0
  %1599 = vmatprep.subr.mxu0 0.0
  %1600 = vmatpush1.msra.mxu0 0.0
  %1601 = vmatprep.subr.mxu0 0.0
  %1602 = vmatpush1.msra.mxu0 0.0
  %1603 = vmatprep.subr.mxu0 0.0
  %1604 = vmatpush1.msra.mxu0 0.0
  %1605 = vmatprep.subr.mxu0 0.0
  %1606 = vmatpush1.msra.mxu0 0.0
  %1607 = vmatprep.subr.mxu0 0.0
  %1608 = vmatpush1.msra.mxu0 0.0
  %1609 = vmatprep.subr.mxu0 0.0
  %1610 = vmatpush1.msra.mxu0 0.0
  %1611 = vmatprep.subr.mxu0 0.0
  %1612 = vmatpush1.msra.mxu0 0.0
  %1613 = vmatprep.subr.mxu0 0.0
  %1614 = vmatpush1.msra.mxu0 0.0
  %1615 = vmatprep.subr.mxu0 0.0
  %1616 = vmatpush1.msra.mxu0 0.0
  %1617 = vmatprep.subr.mxu0 0.0
  %1618 = vmatpush1.msra.mxu0 0.0
  %1619 = vmatprep.subr.mxu0 0.0
  %1620 = vmatpush1.msra.mxu0 0.0
  %1621 = vmatprep.subr.mxu0 0.0
  %1622 = vmatpush1.msra.mxu0 0.0
  %1623 = vmatprep.subr.mxu0 0.0
  %1624 = vmatpush1.msra.mxu0 0.0
  %1625 = vmatprep.mubr.f32.mxu0 0.0
  %1626 = vmatmul.mubr.f32.gmra.mrb[0].mxu0 %v1559
  %v1627 = vpop.f32.mrb[0].mxu0
  %v1628 = vadd.f32 %v1097, %v1627
  %v1629 = vpop.f32.mrb[0].mxu0
  %1630 = vdwg.mxu0
  %v1631 = vmax.f32 %v1628, 0.0
  %v1633 = vsel %vm468, %v1631, 0
  %1635 = vmatprep.subr.mxu0 0.0
  %1636 = vmatpush1.msra.mxu0 %v1102
  %1637 = vmatprep.subr.mxu0 0.0
  %1638 = vmatpush1.msra.mxu0 %v1103
  %1639 = vmatprep.subr.mxu0 0.0
  %1640 = vmatpush1.msra.mxu0 0.0
  %1641 = vmatprep.subr.mxu0 0.0
  %1642 = vmatpush1.msra.mxu0 0.0
  %1643 = vmatprep.subr.mxu0 0.0
  %1644 = vmatpush1.msra.mxu0 0.0
  %1645 = vmatprep.subr.mxu0 0.0
  %1646 = vmatpush1.msra.mxu0 0.0
  %1647 = vmatprep.subr.mxu0 0.0
  %1648 = vmatpush1.msra.mxu0 0.0
  %1649 = vmatprep.subr.mxu0 0.0
  %1650 = vmatpush1.msra.mxu0 0.0
  %1651 = vmatprep.subr.mxu0 0.0
  %1652 = vmatpush1.msra.mxu0 0.0
  %1653 = vmatprep.subr.mxu0 0.0
  %1654 = vmatpush1.msra.mxu0 0.0
  %1655 = vmatprep.subr.mxu0 0.0
  %1656 = vmatpush1.msra.mxu0 0.0
  %1657 = vmatprep.subr.mxu0 0.0
  %1658 = vmatpush1.msra.mxu0 0.0
  %1659 = vmatprep.subr.mxu0 0.0
  %1660 = vmatpush1.msra.mxu0 0.0
  %1661 = vmatprep.subr.mxu0 0.0
  %1662 = vmatpush1.msra.mxu0 0.0
  %1663 = vmatprep.subr.mxu0 0.0
  %1664 = vmatpush1.msra.mxu0 0.0
  %1665 = vmatprep.subr.mxu0 0.0
  %1666 = vmatpush1.msra.mxu0 0.0
  %1667 = vmatprep.subr.mxu0 0.0
  %1668 = vmatpush1.msra.mxu0 0.0
  %1669 = vmatprep.subr.mxu0 0.0
  %1670 = vmatpush1.msra.mxu0 0.0
  %1671 = vmatprep.subr.mxu0 0.0
  %1672 = vmatpush1.msra.mxu0 0.0
  %1673 = vmatprep.subr.mxu0 0.0
  %1674 = vmatpush1.msra.mxu0 0.0
  %1675 = vmatprep.subr.mxu0 0.0
  %1676 = vmatpush1.msra.mxu0 0.0
  %1677 = vmatprep.subr.mxu0 0.0
  %1678 = vmatpush1.msra.mxu0 0.0
  %1679 = vmatprep.subr.mxu0 0.0
  %1680 = vmatpush1.msra.mxu0 0.0
  %1681 = vmatprep.subr.mxu0 0.0
  %1682 = vmatpush1.msra.mxu0 0.0
  %1683 = vmatprep.subr.mxu0 0.0
  %1684 = vmatpush1.msra.mxu0 0.0
  %1685 = vmatprep.subr.mxu0 0.0
  %1686 = vmatpush1.msra.mxu0 0.0
  %1687 = vmatprep.subr.mxu0 0.0
  %1688 = vmatpush1.msra.mxu0 0.0
  %1689 = vmatprep.subr.mxu0 0.0
  %1690 = vmatpush1.msra.mxu0 0.0
  %1691 = vmatprep.subr.mxu0 0.0
  %1692 = vmatpush1.msra.mxu0 0.0
  %1693 = vmatprep.subr.mxu0 0.0
  %1694 = vmatpush1.msra.mxu0 0.0
  %1695 = vmatprep.subr.mxu0 0.0
  %1696 = vmatpush1.msra.mxu0 0.0
  %1697 = vmatprep.subr.mxu0 0.0
  %1698 = vmatpush1.msra.mxu0 0.0
  %1699 = vmatprep.mubr.f32.mxu0 0.0
  %1700 = vmatmul.mubr.f32.gmra.mrb[0].mxu0 %v1633
  %v1701 = vpop.f32.mrb[0].mxu0
  %v1702 = vadd.f32 0.0, %v1701
  %v1703 = vpop.f32.mrb[0].mxu0
  %1704 = vdwg.mxu0
  %v1705 = vadd.f32 %v1557, %v1702
  %v1706 = vadd.f32 %v1705, %v1257
  %v1707 = vld [vmem:[%s13] sm:$0xff]
  %v1708 = vld [vmem:[%s13 + $0x8] sm:$0xff]
  %v1709 = vld [vmem:[%s14] sm:$0x1]
  %v1711 = vlaneseq
  %v1712 = vshrl.u32 %v1711, 7
  %v1713 = vsub.s32 0, %v1712
  %v1714 = vrot.slane %v1709, %v1713
  %v1717 = vsel %vm468, %v1706, 0
  %1719 = vmatprep.subr.mxu0 0.0
  %1720 = vmatpush1.msra.mxu0 %v1707
  %1721 = vmatprep.subr.mxu0 0.0
  %1722 = vmatpush1.msra.mxu0 %v1708
  %1723 = vmatprep.subr.mxu0 0.0
  %1724 = vmatpush1.msra.mxu0 0.0
  %1725 = vmatprep.subr.mxu0 0.0
  %1726 = vmatpush1.msra.mxu0 0.0
  %1727 = vmatprep.subr.mxu0 0.0
  %1728 = vmatpush1.msra.mxu0 0.0
  %1729 = vmatprep.subr.mxu0 0.0
  %1730 = vmatpush1.msra.mxu0 0.0
  %1731 = vmatprep.subr.mxu0 0.0
  %1732 = vmatpush1.msra.mxu0 0.0
  %1733 = vmatprep.subr.mxu0 0.0
  %1734 = vmatpush1.msra.mxu0 0.0
  %1735 = vmatprep.subr.mxu0 0.0
  %1736 = vmatpush1.msra.mxu0 0.0
  %1737 = vmatprep.subr.mxu0 0.0
  %1738 = vmatpush1.msra.mxu0 0.0
  %1739 = vmatprep.subr.mxu0 0.0
  %1740 = vmatpush1.msra.mxu0 0.0
  %1741 = vmatprep.subr.mxu0 0.0
  %1742 = vmatpush1.msra.mxu0 0.0
  %1743 = vmatprep.subr.mxu0 0.0
  %1744 = vmatpush1.msra.mxu0 0.0
  %1745 = vmatprep.subr.mxu0 0.0
  %1746 = vmatpush1.msra.mxu0 0.0
  %1747 = vmatprep.subr.mxu0 0.0
  %1748 = vmatpush1.msra.mxu0 0.0
  %1749 = vmatprep.subr.mxu0 0.0
  %1750 = vmatpush1.msra.mxu0 0.0
  %1751 = vmatprep.subr.mxu0 0.0
  %1752 = vmatpush1.msra.mxu0 0.0
  %1753 = vmatprep.subr.mxu0 0.0
  %1754 = vmatpush1.msra.mxu0 0.0
  %1755 = vmatprep.subr.mxu0 0.0
  %1756 = vmatpush1.msra.mxu0 0.0
  %1757 = vmatprep.subr.mxu0 0.0
  %1758 = vmatpush1.msra.mxu0 0.0
  %1759 = vmatprep.subr.mxu0 0.0
  %1760 = vmatpush1.msra.mxu0 0.0
  %1761 = vmatprep.subr.mxu0 0.0
  %1762 = vmatpush1.msra.mxu0 0.0
  %1763 = vmatprep.subr.mxu0 0.0
  %1764 = vmatpush1.msra.mxu0 0.0
  %1765 = vmatprep.subr.mxu0 0.0
  %1766 = vmatpush1.msra.mxu0 0.0
  %1767 = vmatprep.subr.mxu0 0.0
  %1768 = vmatpush1.msra.mxu0 0.0
  %1769 = vmatprep.subr.mxu0 0.0
  %1770 = vmatpush1.msra.mxu0 0.0
  %1771 = vmatprep.subr.mxu0 0.0
  %1772 = vmatpush1.msra.mxu0 0.0
  %1773 = vmatprep.subr.mxu0 0.0
  %1774 = vmatpush1.msra.mxu0 0.0
  %1775 = vmatprep.subr.mxu0 0.0
  %1776 = vmatpush1.msra.mxu0 0.0
  %1777 = vmatprep.subr.mxu0 0.0
  %1778 = vmatpush1.msra.mxu0 0.0
  %1779 = vmatprep.subr.mxu0 0.0
  %1780 = vmatpush1.msra.mxu0 0.0
  %1781 = vmatprep.subr.mxu0 0.0
  %1782 = vmatpush1.msra.mxu0 0.0
  %1783 = vmatprep.mubr.f32.mxu0 0.0
  %1784 = vmatmul.mubr.f32.gmra.mrb[0].mxu0 %v1261
  %v1785 = vpop.f32.mrb[0].mxu0
  %v1786 = vadd.f32 %v1714, %v1785
  %v1787 = vpop.f32.mrb[0].mxu0
  %1788 = vmatprep.mubr.f32.mxu0 0.0
  %1789 = vmatmul.mubr.f32.gmra.mrb[0].mxu0 %v1410
  %v1790 = vpop.f32.mrb[0].mxu0
  %v1791 = vadd.f32 %v1714, %v1790
  %v1792 = vpop.f32.mrb[0].mxu0
  %1793 = vmatprep.mubr.f32.mxu0 0.0
  %1794 = vmatmul.mubr.f32.gmra.mrb[0].mxu0 %v1559
  %v1795 = vpop.f32.mrb[0].mxu0
  %v1796 = vadd.f32 %v1714, %v1795
  %v1797 = vpop.f32.mrb[0].mxu0
  %1798 = vmatprep.mubr.f32.mxu0 0.0
  %1799 = vmatmul.mubr.f32.gmra.mrb[0].mxu0 %v1717
  %v1800 = vpop.f32.mrb[0].mxu0
  %v1801 = vadd.f32 %v1714, %v1800
  %v1802 = vpop.f32.mrb[0].mxu0
  %1803 = vdwg.mxu0
  %v1804 = vmax.f32 %v1786, 0.0
  %v1805 = vmax.f32 %v1791, 0.0
  %v1806 = vmax.f32 %v1796, 0.0
  %v1807 = vmax.f32 %v1801, 0.0
  %v1808 = vld [vmem:[%s15] sm:$0xff]
  %v1809 = vld [vmem:[%s15 + $0x8] sm:$0xff]
  %v1810 = vld [vmem:[%s16] sm:$0x1]
  %v1812 = vlaneseq
  %v1813 = vshrl.u32 %v1812, 7
  %v1814 = vsub.s32 0, %v1813
  %v1815 = vrot.slane %v1810, %v1814
  %v1818 = vsel %vm468, %v1804, 0
  %v1821 = vsel %vm468, %v1805, 0
  %v1824 = vsel %vm468, %v1806, 0
  %v1827 = vsel %vm468, %v1807, 0
  %1829 = vmatprep.subr.mxu0 0.0
  %1830 = vmatpush1.msra.mxu0 %v1808
  %1831 = vmatprep.subr.mxu0 0.0
  %1832 = vmatpush1.msra.mxu0 %v1809
  %1833 = vmatprep.subr.mxu0 0.0
  %1834 = vmatpush1.msra.mxu0 0.0
  %1835 = vmatprep.subr.mxu0 0.0
  %1836 = vmatpush1.msra.mxu0 0.0
  %1837 = vmatprep.subr.mxu0 0.0
  %1838 = vmatpush1.msra.mxu0 0.0
  %1839 = vmatprep.subr.mxu0 0.0
  %1840 = vmatpush1.msra.mxu0 0.0
  %1841 = vmatprep.subr.mxu0 0.0
  %1842 = vmatpush1.msra.mxu0 0.0
  %1843 = vmatprep.subr.mxu0 0.0
  %1844 = vmatpush1.msra.mxu0 0.0
  %1845 = vmatprep.subr.mxu0 0.0
  %1846 = vmatpush1.msra.mxu0 0.0
  %1847 = vmatprep.subr.mxu0 0.0
  %1848 = vmatpush1.msra.mxu0 0.0
  %1849 = vmatprep.subr.mxu0 0.0
  %1850 = vmatpush1.msra.mxu0 0.0
  %1851 = vmatprep.subr.mxu0 0.0
  %1852 = vmatpush1.msra.mxu0 0.0
  %1853 = vmatprep.subr.mxu0 0.0
  %1854 = vmatpush1.msra.mxu0 0.0
  %1855 = vmatprep.subr.mxu0 0.0
  %1856 = vmatpush1.msra.mxu0 0.0
  %1857 = vmatprep.subr.mxu0 0.0
  %1858 = vmatpush1.msra.mxu0 0.0
  %1859 = vmatprep.subr.mxu0 0.0
  %1860 = vmatpush1.msra.mxu0 0.0
  %1861 = vmatprep.subr.mxu0 0.0
  %1862 = vmatpush1.msra.mxu0 0.0
  %1863 = vmatprep.subr.mxu0 0.0
  %1864 = vmatpush1.msra.mxu0 0.0
  %1865 = vmatprep.subr.mxu0 0.0
  %1866 = vmatpush1.msra.mxu0 0.0
  %1867 = vmatprep.subr.mxu0 0.0
  %1868 = vmatpush1.msra.mxu0 0.0
  %1869 = vmatprep.subr.mxu0 0.0
  %1870 = vmatpush1.msra.mxu0 0.0
  %1871 = vmatprep.subr.mxu0 0.0
  %1872 = vmatpush1.msra.mxu0 0.0
  %1873 = vmatprep.subr.mxu0 0.0
  %1874 = vmatpush1.msra.mxu0 0.0
  %1875 = vmatprep.subr.mxu0 0.0
  %1876 = vmatpush1.msra.mxu0 0.0
  %1877 = vmatprep.subr.mxu0 0.0
  %1878 = vmatpush1.msra.mxu0 0.0
  %1879 = vmatprep.subr.mxu0 0.0
  %1880 = vmatpush1.msra.mxu0 0.0
  %1881 = vmatprep.subr.mxu0 0.0
  %1882 = vmatpush1.msra.mxu0 0.0
  %1883 = vmatprep.subr.mxu0 0.0
  %1884 = vmatpush1.msra.mxu0 0.0
  %1885 = vmatprep.subr.mxu0 0.0
  %1886 = vmatpush1.msra.mxu0 0.0
  %1887 = vmatprep.subr.mxu0 0.0
  %1888 = vmatpush1.msra.mxu0 0.0
  %1889 = vmatprep.subr.mxu0 0.0
  %1890 = vmatpush1.msra.mxu0 0.0
  %1891 = vmatprep.subr.mxu0 0.0
  %1892 = vmatpush1.msra.mxu0 0.0
  %1893 = vmatprep.mubr.f32.mxu0 0.0
  %1894 = vmatmul.mubr.f32.gmra.mrb[0].mxu0 %v1818
  %v1895 = vpop.f32.mrb[0].mxu0
  %v1896 = vadd.f32 %v1815, %v1895
  %v1897 = vpop.f32.mrb[0].mxu0
  %1898 = vmatprep.mubr.f32.mxu0 0.0
  %1899 = vmatmul.mubr.f32.gmra.mrb[0].mxu0 %v1821
  %v1900 = vpop.f32.mrb[0].mxu0
  %v1901 = vadd.f32 %v1815, %v1900
  %v1902 = vpop.f32.mrb[0].mxu0
  %1903 = vmatprep.mubr.f32.mxu0 0.0
  %1904 = vmatmul.mubr.f32.gmra.mrb[0].mxu0 %v1824
  %v1905 = vpop.f32.mrb[0].mxu0
  %v1906 = vadd.f32 %v1815, %v1905
  %v1907 = vpop.f32.mrb[0].mxu0
  %1908 = vmatprep.mubr.f32.mxu0 0.0
  %1909 = vmatmul.mubr.f32.gmra.mrb[0].mxu0 %v1827
  %v1910 = vpop.f32.mrb[0].mxu0
  %v1911 = vadd.f32 %v1815, %v1910
  %v1912 = vpop.f32.mrb[0].mxu0
  %1913 = vdwg.mxu0
  %1914 = vst [vmem:[%s17] sm:$0xff] %v1896
  %1915 = vst [vmem:[%s17 + $0x8] sm:$0xff] %v1901
  %1916 = vst [vmem:[%s17 + $0x10] sm:$0xff] %v1906
  %1917 = vst [vmem:[%s17 + $0x18] sm:$0xff] %v1911
  // Predicated region
  $region70: #{nlds_forward.1} parent=0 // pred_check
    _
  $region71: #{nlds_forward.1} parent=0 // pred_check_branch
    %1919 = sbr.rel (0) target = $region73
  $region72: #{nlds_forward.1} parent=0 // pred_region
    _
  $region73: #{nlds_forward.1} parent=0 // pred_fallthru
    _
  // Predicated region
  $region74: #{nlds_forward.1} parent=0 // pred_check
    _
  $region75: #{nlds_forward.1} parent=0 // pred_check_branch
    %1921 = sbr.rel (0) target = $region77
  $region76: #{nlds_forward.1} parent=0 // pred_region
    _
  $region77: #{nlds_forward.1} parent=0 // pred_fallthru
    _

</llo_original>
